<compile_context>
chip_gen: v7x
topology: tpu7x:2x2x1
jax: 0.10.0
libtpu: 0.0.40
codegen_flags: <defaults>
</compile_context>

<pallas_src>
import math
import functools

import jax
import jax.numpy as jnp
from jax import lax
from jax.experimental import pallas as pl
from jax.experimental.pallas import tpu as pltpu

LN_EPS = 1e-5
VMEM_LIMIT = 48 * 1024 * 1024  # explicit scoped-VMEM budget (fits v5e/v6e/v7x)


# ----------------------------- small helpers ---------------------------------

def _tile(dim, target, quantum):
    """Largest tile <= target that is a multiple of `quantum` and divides `dim`
    (falls back to the full dim so the (8,128) BlockSpec rule always holds)."""
    if dim <= target:
        return dim
    t = (target // quantum) * quantum
    while t >= quantum:
        if dim % t == 0:
            return t
        t -= quantum
    return dim


def _erf(x):
    # Abramowitz & Stegun 7.1.26 (max abs err ~1.5e-7, f32-level accuracy).
    # Uses only mul/add/div/abs/exp, all of which lower cleanly in Mosaic.
    a1, a2, a3 = 0.254829592, -0.284496736, 1.421413741
    a4, a5, p = -1.453152027, 1.061405429, 0.3275911
    sgn = jnp.where(x < 0.0, -1.0, 1.0)
    ax = jnp.abs(x)
    t = 1.0 / (1.0 + p * ax)
    poly = ((((a5 * t + a4) * t + a3) * t + a2) * t + a1) * t
    return sgn * (1.0 - poly * jnp.exp(-ax * ax))


def _gelu(x):
    # torch.nn.functional.gelu default = exact (erf) gelu, computed in f32.
    return 0.5 * x * (1.0 + _erf(x * (1.0 / math.sqrt(2.0))))


def _compiler_params(sem):
    return pltpu.CompilerParams(dimension_semantics=sem,
                                vmem_limit_bytes=VMEM_LIMIT)


# ------------------------------ LayerNorm kernel ------------------------------

def _ln_kernel(x_ref, g_ref, b_ref, out_ref, *, eps):
    x = x_ref[...].astype(jnp.float32)
    mean = jnp.mean(x, axis=-1, keepdims=True)
    var = jnp.mean(jnp.square(x - mean), axis=-1, keepdims=True)   # biased var
    y = (x - mean) * lax.rsqrt(var + eps)
    y = y * g_ref[...].astype(jnp.float32) + b_ref[...].astype(jnp.float32)
    out_ref[...] = y.astype(out_ref.dtype)


def layernorm(x, g, b, eps=LN_EPS, out_dtype=jnp.bfloat16, tm_target=256):
    M, E = x.shape
    tm = _tile(M, tm_target, 8)
    return pl.pallas_call(
        functools.partial(_ln_kernel, eps=eps),
        grid=(M // tm,),
        in_specs=[pl.BlockSpec((tm, E), lambda i: (i, 0)),
                  pl.BlockSpec((1, E), lambda i: (0, 0)),
                  pl.BlockSpec((1, E), lambda i: (0, 0))],
        out_specs=pl.BlockSpec((tm, E), lambda i: (i, 0)),
        out_shape=jax.ShapeDtypeStruct((M, E), out_dtype),
        compiler_params=_compiler_params(("parallel",)),
    )(x, g, b)


# --------------------------- tiled linear (matmul) ----------------------------

def _linear_kernel(*refs, has_bias, has_residual, activation):
    idx = 0
    x_ref = refs[idx]; idx += 1
    w_ref = refs[idx]; idx += 1
    b_ref = refs[idx] if has_bias else None
    idx += int(has_bias)
    r_ref = refs[idx] if has_residual else None
    idx += int(has_residual)
    out_ref = refs[idx]
    acc_ref = refs[idx + 1]

    k = pl.program_id(2)

    @pl.when(k == 0)
    def _():
        acc_ref[...] = jnp.zeros(acc_ref.shape, jnp.float32)

    acc_ref[...] += jnp.dot(x_ref[...], w_ref[...],
                            preferred_element_type=jnp.float32)

    @pl.when(k == pl.num_programs(2) - 1)
    def _():
        y = acc_ref[...]
        if has_bias:
            y = y + b_ref[...].astype(jnp.float32)
        if activation == "gelu":
            y = _gelu(y)
        if has_residual:
            y = y + r_ref[...].astype(jnp.float32)
        out_ref[...] = y.astype(out_ref.dtype)


def linear(x, w, b=None, residual=None, activation=None,
           out_dtype=jnp.bfloat16, tm_target=256, tn_target=512, tk_target=512):
    """y = act(x @ w + b) + residual, tiled over (tokens, out-features, reduction)."""
    M, K = x.shape
    K2, N = w.shape
    assert K == K2
    tm = _tile(M, tm_target, 8)
    tn = _tile(N, tn_target, 128)
    tk = _tile(K, tk_target, 128)
    grid = (M // tm, N // tn, K // tk)

    in_specs = [pl.BlockSpec((tm, tk), lambda i, j, k: (i, k)),
                pl.BlockSpec((tk, tn), lambda i, j, k: (k, j))]
    args = [x, w]
    if b is not None:
        in_specs.append(pl.BlockSpec((1, tn), lambda i, j, k: (0, j)))
        args.append(b)
    if residual is not None:
        in_specs.append(pl.BlockSpec((tm, tn), lambda i, j, k: (i, j)))
        args.append(residual)

    flops = 2 * M * N * K
    trans = M * N if activation == "gelu" else 0
    bytes_accessed = (M * K * x.dtype.itemsize + K * N * w.dtype.itemsize
                      + M * N * jnp.dtype(out_dtype).itemsize)

    return pl.pallas_call(
        functools.partial(_linear_kernel, has_bias=b is not None,
                          has_residual=residual is not None,
                          activation=activation),
        grid=grid,
        in_specs=in_specs,
        out_specs=pl.BlockSpec((tm, tn), lambda i, j, k: (i, j)),
        out_shape=jax.ShapeDtypeStruct((M, N), out_dtype),
        scratch_shapes=[pltpu.VMEM((tm, tn), jnp.float32)],
        compiler_params=_compiler_params(("parallel", "parallel", "arbitrary")),
        cost_estimate=pl.CostEstimate(flops=flops, transcendentals=trans,
                                      bytes_accessed=bytes_accessed),
    )(*args)


# ----------------- flash-style per-channel causal attention -------------------
# num_heads == n_embd  =>  head_dim == 1, SDPA scale == 1/sqrt(1) == 1:
#   out[b,i,h] = sum_{j<=i} softmax_j(q[b,i,h] * k[b,j,h]) * v[b,j,h]

def _attn_kernel(q_ref, k_ref, v_ref, o_ref,
                 m_sc, l_sc, acc_sc, kf_sc, vf_sc, *, tq, tkv):
    qi = pl.program_id(1)
    kv = pl.program_id(3)

    @pl.when(kv == 0)
    def _init():
        m_sc[...] = jnp.full(m_sc.shape, -1e30, jnp.float32)
        l_sc[...] = jnp.zeros(l_sc.shape, jnp.float32)
        acc_sc[...] = jnp.zeros(acc_sc.shape, jnp.float32)

    q_start = qi * tq
    kv_start = kv * tkv

    # Skip kv tiles that lie entirely in the causal-masked future.
    @pl.when(kv_start <= q_start + (tq - 1))
    def _compute():
        q = q_ref[...].astype(jnp.float32)                    # (tq, te)
        kf_sc[...] = k_ref[...].astype(jnp.float32)           # (tkv, te)
        vf_sc[...] = v_ref[...].astype(jnp.float32)
        row = q_start + lax.broadcasted_iota(jnp.int32, q.shape, 0)   # abs q pos

        def score(j):
            k_row = kf_sc[pl.ds(j, 1), :]                     # (1, te)
            s = q * k_row                                     # (tq, te)
            return jnp.where(row >= kv_start + j, s, -1e30)

        # pass 1: tile-local running max (pure VPU, no transcendentals)
        def max_body(j, m_tile):
            return jnp.maximum(m_tile, score(j))
        m_tile = lax.fori_loop(0, tkv, max_body,
                               jnp.full(q.shape, -1e30, jnp.float32))

        m_prev = m_sc[...]
        m_new = jnp.maximum(m_prev, m_tile)
        alpha = jnp.exp(m_prev - m_new)

        # pass 2: probabilities + weighted value accumulation (1 exp / position)
        def acc_body(j, carry):
            l_run, a_run = carry
            p = jnp.exp(score(j) - m_new)                     # (tq, te)
            v_row = vf_sc[pl.ds(j, 1), :]                     # (1, te)
            return l_run + p, a_run + p * v_row
        l_new, acc_new = lax.fori_loop(
            0, tkv, acc_body,
            (jnp.zeros(q.shape, jnp.float32), jnp.zeros(q.shape, jnp.float32)))

        m_sc[...] = m_new
        l_sc[...] = alpha * l_sc[...] + l_new
        acc_sc[...] = alpha * acc_sc[...] + acc_new

    @pl.when(kv == pl.num_programs(3) - 1)
    def _finalize():
        o_ref[...] = (acc_sc[...] *
                      pl.reciprocal(l_sc[...], approx=True)).astype(o_ref.dtype)


def attention(q, k, v, tq_target=128, tkv_target=128, te_target=128):
    B, S, E = q.shape
    tq = _tile(S, tq_target, 8)
    tkv = _tile(S, tkv_target, 8)
    te = _tile(E, te_target, 128)
    grid = (B, S // tq, E // te, S // tkv)

    q_spec = pl.BlockSpec((None, tq, te), lambda b, i, e, j: (b, i, e))
    kv_spec = pl.BlockSpec((None, tkv, te), lambda b, i, e, j: (b, j, e))

    return pl.pallas_call(
        functools.partial(_attn_kernel, tq=tq, tkv=tkv),
        grid=grid,
        in_specs=[q_spec, kv_spec, kv_spec],
        out_specs=pl.BlockSpec((None, tq, te), lambda b, i, e, j: (b, i, e)),
        out_shape=jax.ShapeDtypeStruct((B, S, E), jnp.bfloat16),
        scratch_shapes=[pltpu.VMEM((tq, te), jnp.float32),    # m
                        pltpu.VMEM((tq, te), jnp.float32),    # l
                        pltpu.VMEM((tq, te), jnp.float32),    # acc
                        pltpu.VMEM((tkv, te), jnp.float32),   # k (f32)
                        pltpu.VMEM((tkv, te), jnp.float32)],  # v (f32)
        compiler_params=_compiler_params(
            ("parallel", "parallel", "parallel", "arbitrary")),
        cost_estimate=pl.CostEstimate(flops=6 * B * S * S * E,
                                      transcendentals=B * S * S * E,
                                      bytes_accessed=4 * B * S * E * 2),
    )(q, k, v)


# ------------------------------ model assembly --------------------------------

def run_block(x, blk, eps=LN_EPS):
    B, S, E = x.shape
    x2 = x.reshape(B * S, E)

    # attention branch (pre-LN); residual fused into the output projection
    h = layernorm(x2, blk["ln1_g"], blk["ln1_b"], eps)
    qkv = linear(h, blk["w_att"], blk["b_att"]).reshape(B, S, 3 * E)
    q = qkv[:, :, 0:E]
    k = qkv[:, :, E:2 * E]
    v = qkv[:, :, 2 * E:3 * E]
    a = attention(q, k, v).reshape(B * S, E)
    x2 = linear(a, blk["wo"], blk["bo"], residual=x2)

    # FFN branch (post-LN); residual fused into the down projection
    h2 = layernorm(x2, blk["ln2_g"], blk["ln2_b"], eps)
    f = linear(h2, blk["wfc"], blk["bfc"], activation="gelu")
    x2 = linear(f, blk["wpr"], blk["bpr"], residual=x2)

    return x2.reshape(B, S, E)


def run_head(x, g, b, w, eps=LN_EPS):
    B, S, E = x.shape
    V = w.shape[1]
    x2 = x.reshape(B * S, E)
    h = layernorm(x2, g, b, eps)
    # vocab-tiled lm_head (no bias), f32 logits
    logits = linear(h, w, None, out_dtype=jnp.float32, tn_target=1024)
    return logits.reshape(B, S, V)


def gpt_forward(params, input_ids):
    B, S = input_ids.shape
    # TODO(synk): embedding lookups (gather) stay in plain-JAX glue; LoRA deltas
    #             are pre-folded into the tables.
    tok = jnp.take(params["wte"], input_ids, axis=0)             # (B, S, E) f32
    pos = jnp.take(params["wpe"], jnp.arange(S), axis=0)         # (S, E)
    h = (tok + pos[None, :, :]).astype(jnp.bfloat16)             # bf16 activations
    for blk in params["blocks"]:
        h = run_block(h, blk)
    return run_head(h, params["ln_f_g"], params["ln_f_b"], params["w_head"])


# ------------------------- deterministic parameter init ------------------------

def _lora_linear(key, fin, fout, r, bias, scale=0.02):
    """Fold LoRA: y = x @ W^T + b + (x @ A @ B) * (alpha/r), alpha=r -> scaling=1."""
    k1, k2, k3, k4 = jax.random.split(key, 4)
    W = jax.random.normal(k1, (fout, fin), jnp.float32) * scale   # torch (out, in)
    A = jax.random.normal(k2, (fin, r), jnp.float32) * scale
    Bm = jax.random.normal(k3, (r, fout), jnp.float32) * scale
    w_eff = (W.T + A @ Bm).astype(jnp.bfloat16)                   # (in, out), bf16 MXU
    b = (jax.random.normal(k4, (1, fout), jnp.float32) * scale) if bias else None
    return w_eff, b


def _lora_embedding(key, num, dim, r, scale=0.02):
    k1, k2, k3 = jax.random.split(key, 3)
    W = jax.random.normal(k1, (num, dim), jnp.float32) * scale
    A = jax.random.normal(k2, (num, r), jnp.float32) * scale
    Bm = jax.random.normal(k3, (r, dim), jnp.float32) * scale
    return W + A @ Bm


def init_params(key, *, n_embd, n_layer, n_positions, vocab_size, r):
    keys = jax.random.split(key, 3 + n_layer)
    params = {
        "wte": _lora_embedding(keys[0], vocab_size, n_embd, r),
        "wpe": _lora_embedding(keys[1], n_positions, n_embd, r),
        "ln_f_g": jnp.ones((1, n_embd), jnp.float32),
        "ln_f_b": jnp.zeros((1, n_embd), jnp.float32),
    }
    w_head, _ = _lora_linear(keys[2], n_embd, vocab_size, r, bias=False)
    params["w_head"] = w_head

    blocks = []
    for li in range(n_layer):
        sub = jax.random.split(keys[3 + li], 4)
        w_att, b_att = _lora_linear(sub[0], n_embd, n_embd * 3, r, bias=True)
        wo, bo = _lora_linear(sub[1], n_embd, n_embd, r, bias=True)
        wfc, bfc = _lora_linear(sub[2], n_embd, n_embd * 4, r, bias=True)
        wpr, bpr = _lora_linear(sub[3], n_embd * 4, n_embd, r, bias=True)
        blocks.append({
            "ln1_g": jnp.ones((1, n_embd), jnp.float32),
            "ln1_b": jnp.zeros((1, n_embd), jnp.float32),
            "w_att": w_att, "b_att": b_att,
            "wo": wo, "bo": bo,
            "ln2_g": jnp.ones((1, n_embd), jnp.float32),
            "ln2_b": jnp.zeros((1, n_embd), jnp.float32),
            "wfc": wfc, "bfc": bfc,
            "wpr": wpr, "bpr": bpr,
        })
    params["blocks"] = blocks
    return params


# ----------------------------------- main -------------------------------------

if __name__ == "__main__":
    n_embd = 32
    n_layer = 2
    n_positions = 16
    vocab_size = 64
    r = 4
    batch, seq = 2, 8

    root = jax.random.PRNGKey(0)
    kp, kx = jax.random.split(root)
    params = init_params(kp, n_embd=n_embd, n_layer=n_layer,
                         n_positions=n_positions, vocab_size=vocab_size, r=r)
    input_ids = jax.random.randint(kx, (batch, seq), 0, vocab_size, dtype=jnp.int32)

    fwd = jax.jit(gpt_forward)
    logits = fwd(params, input_ids)
    jax.block_until_ready(logits)
    assert logits.shape == (batch, seq, vocab_size)
    assert logits.dtype == jnp.float32
    assert bool(jnp.all(jnp.isfinite(logits)))
    print("KERNEL_OK")
</pallas_src>

<mosaic_0001>
module attributes {stable_mosaic.version = 11 : i64} {
  func.func @_ln_kernel(%arg0: i32, %arg1: memref<16x32xbf16, #tpu.memory_space<vmem>>, %arg2: memref<1x32xf32, #tpu.memory_space<vmem>>, %arg3: memref<1x32xf32, #tpu.memory_space<vmem>>, %arg4: memref<16x32xbf16, #tpu.memory_space<vmem>>) attributes {dimension_semantics = [#tpu.dimension_semantics<parallel>], iteration_bounds = array<i64: 1>, scalar_prefetch = 0 : i64, scratch_operands = 0 : i64, tpu.core_type = #tpu.core_type<tc>, window_params = [{transform_indices = @transform_0, window_bounds = array<i64: 16, 32>}, {pipeline_mode = #tpu.pipeline_mode<synchronous>, transform_indices = @transform_1, window_bounds = array<i64: 1, 32>}, {pipeline_mode = #tpu.pipeline_mode<synchronous>, transform_indices = @transform_2, window_bounds = array<i64: 1, 32>}, {transform_indices = @transform_3, window_bounds = array<i64: 16, 32>}]} {
    %c0 = arith.constant 0 : index
    %c0_0 = arith.constant 0 : index
    %0 = vector.load %arg1[%c0, %c0_0] : memref<16x32xbf16, #tpu.memory_space<vmem>>, vector<16x32xbf16>
    %1 = arith.extf %0 : vector<16x32xbf16> to vector<16x32xf32>
    %cst = arith.constant dense<0.000000e+00> : vector<16xf32>
    %2 = vector.multi_reduction <add>, %1, %cst [1] : vector<16x32xf32> to vector<16xf32>
    %3 = vector.shape_cast %2 : vector<16xf32> to vector<16x1xf32>
    %cst_1 = arith.constant 3.200000e+01 : f32
    %4 = vector.broadcast %cst_1 : f32 to vector<16x1xf32>
    %5 = arith.divf %3, %4 : vector<16x1xf32>
    %6 = vector.broadcast %5 : vector<16x1xf32> to vector<16x32xf32>
    %7 = arith.subf %1, %6 : vector<16x32xf32>
    %8 = arith.mulf %7, %7 : vector<16x32xf32>
    %cst_2 = arith.constant dense<0.000000e+00> : vector<16xf32>
    %9 = vector.multi_reduction <add>, %8, %cst_2 [1] : vector<16x32xf32> to vector<16xf32>
    %10 = vector.shape_cast %9 : vector<16xf32> to vector<16x1xf32>
    %cst_3 = arith.constant 3.200000e+01 : f32
    %11 = vector.broadcast %cst_3 : f32 to vector<16x1xf32>
    %12 = arith.divf %10, %11 : vector<16x1xf32>
    %13 = vector.broadcast %5 : vector<16x1xf32> to vector<16x32xf32>
    %14 = arith.subf %1, %13 : vector<16x32xf32>
    %cst_4 = arith.constant 9.99999974E-6 : f32
    %15 = vector.broadcast %cst_4 : f32 to vector<16x1xf32>
    %16 = arith.addf %12, %15 : vector<16x1xf32>
    %17 = math.rsqrt %16 : vector<16x1xf32>
    %18 = vector.broadcast %17 : vector<16x1xf32> to vector<16x32xf32>
    %19 = arith.mulf %14, %18 : vector<16x32xf32>
    %c0_5 = arith.constant 0 : index
    %c0_6 = arith.constant 0 : index
    %20 = vector.load %arg2[%c0_5, %c0_6] : memref<1x32xf32, #tpu.memory_space<vmem>>, vector<1x32xf32>
    %21 = vector.broadcast %20 : vector<1x32xf32> to vector<16x32xf32>
    %22 = arith.mulf %19, %21 : vector<16x32xf32>
    %c0_7 = arith.constant 0 : index
    %c0_8 = arith.constant 0 : index
    %23 = vector.load %arg3[%c0_7, %c0_8] : memref<1x32xf32, #tpu.memory_space<vmem>>, vector<1x32xf32>
    %24 = vector.broadcast %23 : vector<1x32xf32> to vector<16x32xf32>
    %25 = arith.addf %22, %24 : vector<16x32xf32>
    %26 = arith.truncf %25 : vector<16x32xf32> to vector<16x32xbf16>
    %c0_9 = arith.constant 0 : index
    %c0_10 = arith.constant 0 : index
    %27 = vector.load %arg4[%c0_9, %c0_10] : memref<16x32xbf16, #tpu.memory_space<vmem>>, vector<16x32xbf16>
    tpu.vector_store %arg4[%c0_9, %c0_10], %26 {strides = array<i32>} : memref<16x32xbf16, #tpu.memory_space<vmem>>, vector<16x32xbf16>,
    return
  }
  func.func @transform_0(%arg0: i32) -> (i32, i32) {
    %c0_i32 = arith.constant 0 : i32
    %c0_i32_0 = arith.constant 0 : i32
    return %arg0, %c0_i32 : i32, i32
  }
  func.func @transform_1(%arg0: i32) -> (i32, i32) {
    %c0_i32 = arith.constant 0 : i32
    %c0_i32_0 = arith.constant 0 : i32
    %c0_i32_1 = arith.constant 0 : i32
    return %c0_i32, %c0_i32_0 : i32, i32
  }
  func.func @transform_2(%arg0: i32) -> (i32, i32) {
    %c0_i32 = arith.constant 0 : i32
    %c0_i32_0 = arith.constant 0 : i32
    %c0_i32_1 = arith.constant 0 : i32
    return %c0_i32, %c0_i32_0 : i32, i32
  }
  func.func @transform_3(%arg0: i32) -> (i32, i32) {
    %c0_i32 = arith.constant 0 : i32
    %c0_i32_0 = arith.constant 0 : i32
    return %arg0, %c0_i32 : i32, i32
  }
}

module attributes {stable_mosaic.version = 11 : i64} {
  func.func @_linear_kernel(%arg0: i32, %arg1: i32, %arg2: i32, %arg3: memref<16x32xbf16, #tpu.memory_space<vmem>>, %arg4: memref<32x96xbf16, #tpu.memory_space<vmem>>, %arg5: memref<1x96xf32, #tpu.memory_space<vmem>>, %arg6: memref<16x96xbf16, #tpu.memory_space<vmem>>, %arg7: memref<16x96xf32, #tpu.memory_space<vmem>>) attributes {dimension_semantics = [#tpu.dimension_semantics<parallel>, #tpu.dimension_semantics<parallel>, #tpu.dimension_semantics<arbitrary>], iteration_bounds = array<i64: 1, 1, 1>, scalar_prefetch = 0 : i64, scratch_operands = 1 : i64, tpu.core_type = #tpu.core_type<tc>, window_params = [{transform_indices = @transform_0, window_bounds = array<i64: 16, 32>}, {transform_indices = @transform_1, window_bounds = array<i64: 32, 96>}, {transform_indices = @transform_2, window_bounds = array<i64: 1, 96>}, {transform_indices = @transform_3, window_bounds = array<i64: 16, 96>}]} {
    %c0_i32 = arith.constant 0 : i32
    %0 = arith.cmpi eq, %arg2, %c0_i32 : i32
    %1 = arith.extui %0 : i1 to i32
    %c0_i32_0 = arith.constant 0 : i32
    %2 = arith.cmpi ne, %1, %c0_i32_0 : i32
    scf.if %2 {
      %cst_10 = arith.constant 0.000000e+00 : f32
      %12 = vector.broadcast %cst_10 : f32 to vector<16x96xf32>
      %c0_11 = arith.constant 0 : index
      %c0_12 = arith.constant 0 : index
      %13 = vector.load %arg7[%c0_11, %c0_12] : memref<16x96xf32, #tpu.memory_space<vmem>>, vector<16x96xf32>
      tpu.vector_store %arg7[%c0_11, %c0_12], %12 {strides = array<i32>} : memref<16x96xf32, #tpu.memory_space<vmem>>, vector<16x96xf32>,
    } else {
    }
    %c0 = arith.constant 0 : index
    %c0_1 = arith.constant 0 : index
    %3 = vector.load %arg7[%c0, %c0_1] : memref<16x96xf32, #tpu.memory_space<vmem>>, vector<16x96xf32>
    %c0_2 = arith.constant 0 : index
    %c0_3 = arith.constant 0 : index
    %4 = vector.load %arg3[%c0_2, %c0_3] : memref<16x32xbf16, #tpu.memory_space<vmem>>, vector<16x32xbf16>
    %c0_4 = arith.constant 0 : index
    %c0_5 = arith.constant 0 : index
    %5 = vector.load %arg4[%c0_4, %c0_5] : memref<32x96xbf16, #tpu.memory_space<vmem>>, vector<32x96xbf16>
    %cst = arith.constant dense<0.000000e+00> : vector<16x96xf32>
    %6 = tpu.matmul %4, %5, %cst {dimension_numbers = #tpu.dot_dimension_numbers<[1], [0], [0], [1], [0, 0, 1, 1], [], []>} : vector<16x32xbf16>, vector<32x96xbf16>, vector<16x96xf32> -> vector<16x96xf32>
    %7 = arith.addf %3, %6 : vector<16x96xf32>
    %c0_6 = arith.constant 0 : index
    %c0_7 = arith.constant 0 : index
    %8 = vector.load %arg7[%c0_6, %c0_7] : memref<16x96xf32, #tpu.memory_space<vmem>>, vector<16x96xf32>
    tpu.vector_store %arg7[%c0_6, %c0_7], %7 {strides = array<i32>} : memref<16x96xf32, #tpu.memory_space<vmem>>, vector<16x96xf32>,
    %c0_i32_8 = arith.constant 0 : i32
    %9 = arith.cmpi eq, %arg2, %c0_i32_8 : i32
    %10 = arith.extui %9 : i1 to i32
    %c0_i32_9 = arith.constant 0 : i32
    %11 = arith.cmpi ne, %10, %c0_i32_9 : i32
    scf.if %11 {
      %c0_10 = arith.constant 0 : index
      %c0_11 = arith.constant 0 : index
      %12 = vector.load %arg7[%c0_10, %c0_11] : memref<16x96xf32, #tpu.memory_space<vmem>>, vector<16x96xf32>
      %c0_12 = arith.constant 0 : index
      %c0_13 = arith.constant 0 : index
      %13 = vector.load %arg5[%c0_12, %c0_13] : memref<1x96xf32, #tpu.memory_space<vmem>>, vector<1x96xf32>
      %14 = vector.broadcast %13 : vector<1x96xf32> to vector<16x96xf32>
      %15 = arith.addf %12, %14 : vector<16x96xf32>
      %16 = arith.truncf %15 : vector<16x96xf32> to vector<16x96xbf16>
      %c0_14 = arith.constant 0 : index
      %c0_15 = arith.constant 0 : index
      %17 = vector.load %arg6[%c0_14, %c0_15] : memref<16x96xbf16, #tpu.memory_space<vmem>>, vector<16x96xbf16>
      tpu.vector_store %arg6[%c0_14, %c0_15], %16 {strides = array<i32>} : memref<16x96xbf16, #tpu.memory_space<vmem>>, vector<16x96xbf16>,
    } else {
    }
    return
  }
  func.func @transform_0(%arg0: i32, %arg1: i32, %arg2: i32) -> (i32, i32) {
    %c0_i32 = arith.constant 0 : i32
    return %arg0, %arg2 : i32, i32
  }
  func.func @transform_1(%arg0: i32, %arg1: i32, %arg2: i32) -> (i32, i32) {
    %c0_i32 = arith.constant 0 : i32
    return %arg2, %arg1 : i32, i32
  }
  func.func @transform_2(%arg0: i32, %arg1: i32, %arg2: i32) -> (i32, i32) {
    %c0_i32 = arith.constant 0 : i32
    %c0_i32_0 = arith.constant 0 : i32
    return %c0_i32, %arg1 : i32, i32
  }
  func.func @transform_3(%arg0: i32, %arg1: i32, %arg2: i32) -> (i32, i32) {
    %c0_i32 = arith.constant 0 : i32
    return %arg0, %arg1 : i32, i32
  }
}

module attributes {stable_mosaic.version = 11 : i64} {
  func.func @_attn_kernel(%arg0: i32, %arg1: i32, %arg2: i32, %arg3: i32, %arg4: memref<1x8x32xbf16, #tpu.memory_space<vmem>>, %arg5: memref<1x8x32xbf16, #tpu.memory_space<vmem>>, %arg6: memref<1x8x32xbf16, #tpu.memory_space<vmem>>, %arg7: memref<1x8x32xbf16, #tpu.memory_space<vmem>>, %arg8: memref<8x32xf32, #tpu.memory_space<vmem>>, %arg9: memref<8x32xf32, #tpu.memory_space<vmem>>, %arg10: memref<8x32xf32, #tpu.memory_space<vmem>>, %arg11: memref<8x32xf32, #tpu.memory_space<vmem>>, %arg12: memref<8x32xf32, #tpu.memory_space<vmem>>) attributes {dimension_semantics = [#tpu.dimension_semantics<parallel>, #tpu.dimension_semantics<parallel>, #tpu.dimension_semantics<parallel>, #tpu.dimension_semantics<arbitrary>], iteration_bounds = array<i64: 2, 1, 1, 1>, scalar_prefetch = 0 : i64, scratch_operands = 5 : i64, tpu.core_type = #tpu.core_type<tc>, window_params = [{transform_indices = @transform_0, window_bounds = array<i64: 1, 8, 32>}, {transform_indices = @transform_1, window_bounds = array<i64: 1, 8, 32>}, {transform_indices = @transform_2, window_bounds = array<i64: 1, 8, 32>}, {transform_indices = @transform_3, window_bounds = array<i64: 1, 8, 32>}]} {
    %c0_i32 = arith.constant 0 : i32
    %0 = arith.cmpi eq, %arg3, %c0_i32 : i32
    %1 = arith.extui %0 : i1 to i32
    %c0_i32_0 = arith.constant 0 : i32
    %2 = arith.cmpi ne, %1, %c0_i32_0 : i32
    scf.if %2 {
      %cst = arith.constant -1.000000e+30 : f32
      %12 = vector.broadcast %cst : f32 to vector<8x32xf32>
      %c0 = arith.constant 0 : index
      %c0_5 = arith.constant 0 : index
      %13 = vector.load %arg8[%c0, %c0_5] : memref<8x32xf32, #tpu.memory_space<vmem>>, vector<8x32xf32>
      tpu.vector_store %arg8[%c0, %c0_5], %12 {strides = array<i32>} : memref<8x32xf32, #tpu.memory_space<vmem>>, vector<8x32xf32>,
      %cst_6 = arith.constant 0.000000e+00 : f32
      %14 = vector.broadcast %cst_6 : f32 to vector<8x32xf32>
      %c0_7 = arith.constant 0 : index
      %c0_8 = arith.constant 0 : index
      %15 = vector.load %arg9[%c0_7, %c0_8] : memref<8x32xf32, #tpu.memory_space<vmem>>, vector<8x32xf32>
      tpu.vector_store %arg9[%c0_7, %c0_8], %14 {strides = array<i32>} : memref<8x32xf32, #tpu.memory_space<vmem>>, vector<8x32xf32>,
      %cst_9 = arith.constant 0.000000e+00 : f32
      %16 = vector.broadcast %cst_9 : f32 to vector<8x32xf32>
      %c0_10 = arith.constant 0 : index
      %c0_11 = arith.constant 0 : index
      %17 = vector.load %arg10[%c0_10, %c0_11] : memref<8x32xf32, #tpu.memory_space<vmem>>, vector<8x32xf32>
      tpu.vector_store %arg10[%c0_10, %c0_11], %16 {strides = array<i32>} : memref<8x32xf32, #tpu.memory_space<vmem>>, vector<8x32xf32>,
    } else {
    }
    %c8_i32 = arith.constant 8 : i32
    %3 = arith.muli %arg1, %c8_i32 : i32
    %c8_i32_1 = arith.constant 8 : i32
    %4 = arith.muli %arg3, %c8_i32_1 : i32
    %c7_i32 = arith.constant 7 : i32
    %5 = arith.addi %3, %c7_i32 : i32
    %6 = arith.cmpi sle, %4, %5 : i32
    %7 = arith.extui %6 : i1 to i32
    %c0_i32_2 = arith.constant 0 : i32
    %8 = arith.cmpi ne, %7, %c0_i32_2 : i32
    scf.if %8 {
      %c0 = arith.constant 0 : index
      %c0_5 = arith.constant 0 : index
      %c0_6 = arith.constant 0 : index
      %12 = vector.load %arg4[%c0, %c0_5, %c0_6] : memref<1x8x32xbf16, #tpu.memory_space<vmem>>, vector<1x8x32xbf16>
      %13 = vector.shape_cast %12 : vector<1x8x32xbf16> to vector<8x32xbf16>
      %14 = arith.extf %13 : vector<8x32xbf16> to vector<8x32xf32>
      %c0_7 = arith.constant 0 : index
      %c0_8 = arith.constant 0 : index
      %c0_9 = arith.constant 0 : index
      %15 = vector.load %arg5[%c0_7, %c0_8, %c0_9] : memref<1x8x32xbf16, #tpu.memory_space<vmem>>, vector<1x8x32xbf16>
      %16 = vector.shape_cast %15 : vector<1x8x32xbf16> to vector<8x32xbf16>
      %17 = arith.extf %16 : vector<8x32xbf16> to vector<8x32xf32>
      %c0_10 = arith.constant 0 : index
      %c0_11 = arith.constant 0 : index
      %18 = vector.load %arg11[%c0_10, %c0_11] : memref<8x32xf32, #tpu.memory_space<vmem>>, vector<8x32xf32>
      tpu.vector_store %arg11[%c0_10, %c0_11], %17 {strides = array<i32>} : memref<8x32xf32, #tpu.memory_space<vmem>>, vector<8x32xf32>,
      %c0_12 = arith.constant 0 : index
      %c0_13 = arith.constant 0 : index
      %c0_14 = arith.constant 0 : index
      %19 = vector.load %arg6[%c0_12, %c0_13, %c0_14] : memref<1x8x32xbf16, #tpu.memory_space<vmem>>, vector<1x8x32xbf16>
      %20 = vector.shape_cast %19 : vector<1x8x32xbf16> to vector<8x32xbf16>
      %21 = arith.extf %20 : vector<8x32xbf16> to vector<8x32xf32>
      %c0_15 = arith.constant 0 : index
      %c0_16 = arith.constant 0 : index
      %22 = vector.load %arg12[%c0_15, %c0_16] : memref<8x32xf32, #tpu.memory_space<vmem>>, vector<8x32xf32>
      tpu.vector_store %arg12[%c0_15, %c0_16], %21 {strides = array<i32>} : memref<8x32xf32, #tpu.memory_space<vmem>>, vector<8x32xf32>,
      %23 = tpu.iota {dimensions = array<i32: 0>} : vector<8x32xi32>
      %24 = vector.broadcast %3 : i32 to vector<8x32xi32>
      %25 = arith.addi %24, %23 : vector<8x32xi32>
      %cst = arith.constant -1.000000e+30 : f32
      %26 = vector.broadcast %cst : f32 to vector<8x32xf32>
      %c0_i32_17 = arith.constant 0 : i32
      %c8_i32_18 = arith.constant 8 : i32
      %27 = arith.addi %c0_i32_17, %c8_i32_18 : i32
      %c1_i32 = arith.constant 1 : i32
      %28 = scf.for %arg13 = %c0_i32_17 to %27 step %c1_i32 iter_args(%arg14 = %26) -> (vector<8x32xf32>)  : i32 {
        %46 = arith.index_cast %arg13 : i32 to index
        %c0_38 = arith.constant 0 : index
        %47 = vector.load %arg11[%46, %c0_38] : memref<8x32xf32, #tpu.memory_space<vmem>>, vector<1x32xf32>
        %48 = vector.broadcast %47 : vector<1x32xf32> to vector<8x32xf32>
        %49 = arith.mulf %14, %48 : vector<8x32xf32>
        %50 = arith.addi %4, %arg13 : i32
        %51 = vector.broadcast %50 : i32 to vector<8x32xi32>
        %52 = arith.cmpi sge, %25, %51 : vector<8x32xi32>
        %cst_39 = arith.constant -1.000000e+30 : f32
        %53 = vector.broadcast %cst_39 : f32 to vector<8x32xf32>
        %54 = arith.select %52, %49, %53 : vector<8x32xi1>, vector<8x32xf32>
        %55 = arith.maximumf %arg14, %54 : vector<8x32xf32>
        scf.yield %55 : vector<8x32xf32>
      }
      %c8_i32_19 = arith.constant 8 : i32
      %c0_20 = arith.constant 0 : index
      %c0_21 = arith.constant 0 : index
      %29 = vector.load %arg8[%c0_20, %c0_21] : memref<8x32xf32, #tpu.memory_space<vmem>>, vector<8x32xf32>
      %30 = arith.maximumf %29, %28 : vector<8x32xf32>
      %31 = arith.subf %29, %30 : vector<8x32xf32>
      %32 = math.exp %31 : vector<8x32xf32>
      %cst_22 = arith.constant 0.000000e+00 : f32
      %33 = vector.broadcast %cst_22 : f32 to vector<8x32xf32>
      %cst_23 = arith.constant 0.000000e+00 : f32
      %34 = vector.broadcast %cst_23 : f32 to vector<8x32xf32>
      %c0_i32_24 = arith.constant 0 : i32
      %c8_i32_25 = arith.constant 8 : i32
      %35 = arith.addi %c0_i32_24, %c8_i32_25 : i32
      %c1_i32_26 = arith.constant 1 : i32
      %36:2 = scf.for %arg13 = %c0_i32_24 to %35 step %c1_i32_26 iter_args(%arg14 = %33, %arg15 = %34) -> (vector<8x32xf32>, vector<8x32xf32>)  : i32 {
        %46 = arith.index_cast %arg13 : i32 to index
        %c0_38 = arith.constant 0 : index
        %47 = vector.load %arg11[%46, %c0_38] : memref<8x32xf32, #tpu.memory_space<vmem>>, vector<1x32xf32>
        %48 = vector.broadcast %47 : vector<1x32xf32> to vector<8x32xf32>
        %49 = arith.mulf %14, %48 : vector<8x32xf32>
        %50 = arith.addi %4, %arg13 : i32
        %51 = vector.broadcast %50 : i32 to vector<8x32xi32>
        %52 = arith.cmpi sge, %25, %51 : vector<8x32xi32>
        %cst_39 = arith.constant -1.000000e+30 : f32
        %53 = vector.broadcast %cst_39 : f32 to vector<8x32xf32>
        %54 = arith.select %52, %49, %53 : vector<8x32xi1>, vector<8x32xf32>
        %55 = arith.subf %54, %30 : vector<8x32xf32>
        %56 = math.exp %55 : vector<8x32xf32>
        %57 = arith.index_cast %arg13 : i32 to index
        %c0_40 = arith.constant 0 : index
        %58 = vector.load %arg12[%57, %c0_40] : memref<8x32xf32, #tpu.memory_space<vmem>>, vector<1x32xf32>
        %59 = arith.addf %arg14, %56 : vector<8x32xf32>
        %60 = vector.broadcast %58 : vector<1x32xf32> to vector<8x32xf32>
        %61 = arith.mulf %56, %60 : vector<8x32xf32>
        %62 = arith.addf %arg15, %61 : vector<8x32xf32>
        scf.yield %59, %62 : vector<8x32xf32>, vector<8x32xf32>
      }
      %c8_i32_27 = arith.constant 8 : i32
      %c0_28 = arith.constant 0 : index
      %c0_29 = arith.constant 0 : index
      %37 = vector.load %arg8[%c0_28, %c0_29] : memref<8x32xf32, #tpu.memory_space<vmem>>, vector<8x32xf32>
      tpu.vector_store %arg8[%c0_28, %c0_29], %30 {strides = array<i32>} : memref<8x32xf32, #tpu.memory_space<vmem>>, vector<8x32xf32>,
      %c0_30 = arith.constant 0 : index
      %c0_31 = arith.constant 0 : index
      %38 = vector.load %arg9[%c0_30, %c0_31] : memref<8x32xf32, #tpu.memory_space<vmem>>, vector<8x32xf32>
      %39 = arith.mulf %32, %38 : vector<8x32xf32>
      %40 = arith.addf %39, %36#0 : vector<8x32xf32>
      %c0_32 = arith.constant 0 : index
      %c0_33 = arith.constant 0 : index
      %41 = vector.load %arg9[%c0_32, %c0_33] : memref<8x32xf32, #tpu.memory_space<vmem>>, vector<8x32xf32>
      tpu.vector_store %arg9[%c0_32, %c0_33], %40 {strides = array<i32>} : memref<8x32xf32, #tpu.memory_space<vmem>>, vector<8x32xf32>,
      %c0_34 = arith.constant 0 : index
      %c0_35 = arith.constant 0 : index
      %42 = vector.load %arg10[%c0_34, %c0_35] : memref<8x32xf32, #tpu.memory_space<vmem>>, vector<8x32xf32>
      %43 = arith.mulf %32, %42 : vector<8x32xf32>
      %44 = arith.addf %43, %36#1 : vector<8x32xf32>
      %c0_36 = arith.constant 0 : index
      %c0_37 = arith.constant 0 : index
      %45 = vector.load %arg10[%c0_36, %c0_37] : memref<8x32xf32, #tpu.memory_space<vmem>>, vector<8x32xf32>
      tpu.vector_store %arg10[%c0_36, %c0_37], %44 {strides = array<i32>} : memref<8x32xf32, #tpu.memory_space<vmem>>, vector<8x32xf32>,
    } else {
    }
    %c0_i32_3 = arith.constant 0 : i32
    %9 = arith.cmpi eq, %arg3, %c0_i32_3 : i32
    %10 = arith.extui %9 : i1 to i32
    %c0_i32_4 = arith.constant 0 : i32
    %11 = arith.cmpi ne, %10, %c0_i32_4 : i32
    scf.if %11 {
      %c0 = arith.constant 0 : index
      %c0_5 = arith.constant 0 : index
      %12 = vector.load %arg10[%c0, %c0_5] : memref<8x32xf32, #tpu.memory_space<vmem>>, vector<8x32xf32>
      %c0_6 = arith.constant 0 : index
      %c0_7 = arith.constant 0 : index
      %13 = vector.load %arg9[%c0_6, %c0_7] : memref<8x32xf32, #tpu.memory_space<vmem>>, vector<8x32xf32>
      %14 = tpu.reciprocal %13 {approx = true} : vector<8x32xf32> -> vector<8x32xf32>
      %15 = arith.mulf %12, %14 : vector<8x32xf32>
      %16 = arith.truncf %15 : vector<8x32xf32> to vector<8x32xbf16>
      %c0_8 = arith.constant 0 : index
      %c0_9 = arith.constant 0 : index
      %c0_10 = arith.constant 0 : index
      %17 = vector.load %arg7[%c0_8, %c0_9, %c0_10] : memref<1x8x32xbf16, #tpu.memory_space<vmem>>, vector<1x8x32xbf16>
      %18 = vector.shape_cast %17 : vector<1x8x32xbf16> to vector<8x32xbf16>
      %19 = vector.shape_cast %16 : vector<8x32xbf16> to vector<1x8x32xbf16>
      tpu.vector_store %arg7[%c0_8, %c0_9, %c0_10], %19 {strides = array<i32>} : memref<1x8x32xbf16, #tpu.memory_space<vmem>>, vector<1x8x32xbf16>,
    } else {
    }
    return
  }
  func.func @transform_0(%arg0: i32, %arg1: i32, %arg2: i32, %arg3: i32) -> (i32, i32, i32) {
    %c0_i32 = arith.constant 0 : i32
    return %arg0, %arg1, %arg2 : i32, i32, i32
  }
  func.func @transform_1(%arg0: i32, %arg1: i32, %arg2: i32, %arg3: i32) -> (i32, i32, i32) {
    %c0_i32 = arith.constant 0 : i32
    return %arg0, %arg3, %arg2 : i32, i32, i32
  }
  func.func @transform_2(%arg0: i32, %arg1: i32, %arg2: i32, %arg3: i32) -> (i32, i32, i32) {
    %c0_i32 = arith.constant 0 : i32
    return %arg0, %arg3, %arg2 : i32, i32, i32
  }
  func.func @transform_3(%arg0: i32, %arg1: i32, %arg2: i32, %arg3: i32) -> (i32, i32, i32) {
    %c0_i32 = arith.constant 0 : i32
    return %arg0, %arg1, %arg2 : i32, i32, i32
  }
}

module attributes {stable_mosaic.version = 11 : i64} {
  func.func @_linear_kernel(%arg0: i32, %arg1: i32, %arg2: i32, %arg3: memref<16x32xbf16, #tpu.memory_space<vmem>>, %arg4: memref<32x32xbf16, #tpu.memory_space<vmem>>, %arg5: memref<1x32xf32, #tpu.memory_space<vmem>>, %arg6: memref<16x32xbf16, #tpu.memory_space<vmem>>, %arg7: memref<16x32xbf16, #tpu.memory_space<vmem>>, %arg8: memref<16x32xf32, #tpu.memory_space<vmem>>) attributes {dimension_semantics = [#tpu.dimension_semantics<parallel>, #tpu.dimension_semantics<parallel>, #tpu.dimension_semantics<arbitrary>], iteration_bounds = array<i64: 1, 1, 1>, scalar_prefetch = 0 : i64, scratch_operands = 1 : i64, tpu.core_type = #tpu.core_type<tc>, window_params = [{transform_indices = @transform_0, window_bounds = array<i64: 16, 32>}, {transform_indices = @transform_1, window_bounds = array<i64: 32, 32>}, {transform_indices = @transform_2, window_bounds = array<i64: 1, 32>}, {transform_indices = @transform_3, window_bounds = array<i64: 16, 32>}, {transform_indices = @transform_4, window_bounds = array<i64: 16, 32>}]} {
    %c0_i32 = arith.constant 0 : i32
    %0 = arith.cmpi eq, %arg2, %c0_i32 : i32
    %1 = arith.extui %0 : i1 to i32
    %c0_i32_0 = arith.constant 0 : i32
    %2 = arith.cmpi ne, %1, %c0_i32_0 : i32
    scf.if %2 {
      %cst_10 = arith.constant 0.000000e+00 : f32
      %12 = vector.broadcast %cst_10 : f32 to vector<16x32xf32>
      %c0_11 = arith.constant 0 : index
      %c0_12 = arith.constant 0 : index
      %13 = vector.load %arg8[%c0_11, %c0_12] : memref<16x32xf32, #tpu.memory_space<vmem>>, vector<16x32xf32>
      tpu.vector_store %arg8[%c0_11, %c0_12], %12 {strides = array<i32>} : memref<16x32xf32, #tpu.memory_space<vmem>>, vector<16x32xf32>,
    } else {
    }
    %c0 = arith.constant 0 : index
    %c0_1 = arith.constant 0 : index
    %3 = vector.load %arg8[%c0, %c0_1] : memref<16x32xf32, #tpu.memory_space<vmem>>, vector<16x32xf32>
    %c0_2 = arith.constant 0 : index
    %c0_3 = arith.constant 0 : index
    %4 = vector.load %arg3[%c0_2, %c0_3] : memref<16x32xbf16, #tpu.memory_space<vmem>>, vector<16x32xbf16>
    %c0_4 = arith.constant 0 : index
    %c0_5 = arith.constant 0 : index
    %5 = vector.load %arg4[%c0_4, %c0_5] : memref<32x32xbf16, #tpu.memory_space<vmem>>, vector<32x32xbf16>
    %cst = arith.constant dense<0.000000e+00> : vector<16x32xf32>
    %6 = tpu.matmul %4, %5, %cst {dimension_numbers = #tpu.dot_dimension_numbers<[1], [0], [0], [1], [0, 0, 1, 1], [], []>} : vector<16x32xbf16>, vector<32x32xbf16>, vector<16x32xf32> -> vector<16x32xf32>
    %7 = arith.addf %3, %6 : vector<16x32xf32>
    %c0_6 = arith.constant 0 : index
    %c0_7 = arith.constant 0 : index
    %8 = vector.load %arg8[%c0_6, %c0_7] : memref<16x32xf32, #tpu.memory_space<vmem>>, vector<16x32xf32>
    tpu.vector_store %arg8[%c0_6, %c0_7], %7 {strides = array<i32>} : memref<16x32xf32, #tpu.memory_space<vmem>>, vector<16x32xf32>,
    %c0_i32_8 = arith.constant 0 : i32
    %9 = arith.cmpi eq, %arg2, %c0_i32_8 : i32
    %10 = arith.extui %9 : i1 to i32
    %c0_i32_9 = arith.constant 0 : i32
    %11 = arith.cmpi ne, %10, %c0_i32_9 : i32
    scf.if %11 {
      %c0_10 = arith.constant 0 : index
      %c0_11 = arith.constant 0 : index
      %12 = vector.load %arg8[%c0_10, %c0_11] : memref<16x32xf32, #tpu.memory_space<vmem>>, vector<16x32xf32>
      %c0_12 = arith.constant 0 : index
      %c0_13 = arith.constant 0 : index
      %13 = vector.load %arg5[%c0_12, %c0_13] : memref<1x32xf32, #tpu.memory_space<vmem>>, vector<1x32xf32>
      %14 = vector.broadcast %13 : vector<1x32xf32> to vector<16x32xf32>
      %15 = arith.addf %12, %14 : vector<16x32xf32>
      %c0_14 = arith.constant 0 : index
      %c0_15 = arith.constant 0 : index
      %16 = vector.load %arg6[%c0_14, %c0_15] : memref<16x32xbf16, #tpu.memory_space<vmem>>, vector<16x32xbf16>
      %17 = arith.extf %16 : vector<16x32xbf16> to vector<16x32xf32>
      %18 = arith.addf %15, %17 : vector<16x32xf32>
      %19 = arith.truncf %18 : vector<16x32xf32> to vector<16x32xbf16>
      %c0_16 = arith.constant 0 : index
      %c0_17 = arith.constant 0 : index
      %20 = vector.load %arg7[%c0_16, %c0_17] : memref<16x32xbf16, #tpu.memory_space<vmem>>, vector<16x32xbf16>
      tpu.vector_store %arg7[%c0_16, %c0_17], %19 {strides = array<i32>} : memref<16x32xbf16, #tpu.memory_space<vmem>>, vector<16x32xbf16>,
    } else {
    }
    return
  }
  func.func @transform_0(%arg0: i32, %arg1: i32, %arg2: i32) -> (i32, i32) {
    %c0_i32 = arith.constant 0 : i32
    return %arg0, %arg2 : i32, i32
  }
  func.func @transform_1(%arg0: i32, %arg1: i32, %arg2: i32) -> (i32, i32) {
    %c0_i32 = arith.constant 0 : i32
    return %arg2, %arg1 : i32, i32
  }
  func.func @transform_2(%arg0: i32, %arg1: i32, %arg2: i32) -> (i32, i32) {
    %c0_i32 = arith.constant 0 : i32
    %c0_i32_0 = arith.constant 0 : i32
    return %c0_i32, %arg1 : i32, i32
  }
  func.func @transform_3(%arg0: i32, %arg1: i32, %arg2: i32) -> (i32, i32) {
    %c0_i32 = arith.constant 0 : i32
    return %arg0, %arg1 : i32, i32
  }
  func.func @transform_4(%arg0: i32, %arg1: i32, %arg2: i32) -> (i32, i32) {
    %c0_i32 = arith.constant 0 : i32
    return %arg0, %arg1 : i32, i32
  }
}

module attributes {stable_mosaic.version = 11 : i64} {
  func.func @_linear_kernel(%arg0: i32, %arg1: i32, %arg2: i32, %arg3: memref<16x128xbf16, #tpu.memory_space<vmem>>, %arg4: memref<128x32xbf16, #tpu.memory_space<vmem>>, %arg5: memref<1x32xf32, #tpu.memory_space<vmem>>, %arg6: memref<16x32xbf16, #tpu.memory_space<vmem>>, %arg7: memref<16x32xbf16, #tpu.memory_space<vmem>>, %arg8: memref<16x32xf32, #tpu.memory_space<vmem>>) attributes {dimension_semantics = [#tpu.dimension_semantics<parallel>, #tpu.dimension_semantics<parallel>, #tpu.dimension_semantics<arbitrary>], iteration_bounds = array<i64: 1, 1, 1>, scalar_prefetch = 0 : i64, scratch_operands = 1 : i64, tpu.core_type = #tpu.core_type<tc>, window_params = [{transform_indices = @transform_0, window_bounds = array<i64: 16, 128>}, {transform_indices = @transform_1, window_bounds = array<i64: 128, 32>}, {transform_indices = @transform_2, window_bounds = array<i64: 1, 32>}, {transform_indices = @transform_3, window_bounds = array<i64: 16, 32>}, {transform_indices = @transform_4, window_bounds = array<i64: 16, 32>}]} {
    %c0_i32 = arith.constant 0 : i32
    %0 = arith.cmpi eq, %arg2, %c0_i32 : i32
    %1 = arith.extui %0 : i1 to i32
    %c0_i32_0 = arith.constant 0 : i32
    %2 = arith.cmpi ne, %1, %c0_i32_0 : i32
    scf.if %2 {
      %cst_10 = arith.constant 0.000000e+00 : f32
      %12 = vector.broadcast %cst_10 : f32 to vector<16x32xf32>
      %c0_11 = arith.constant 0 : index
      %c0_12 = arith.constant 0 : index
      %13 = vector.load %arg8[%c0_11, %c0_12] : memref<16x32xf32, #tpu.memory_space<vmem>>, vector<16x32xf32>
      tpu.vector_store %arg8[%c0_11, %c0_12], %12 {strides = array<i32>} : memref<16x32xf32, #tpu.memory_space<vmem>>, vector<16x32xf32>,
    } else {
    }
    %c0 = arith.constant 0 : index
    %c0_1 = arith.constant 0 : index
    %3 = vector.load %arg8[%c0, %c0_1] : memref<16x32xf32, #tpu.memory_space<vmem>>, vector<16x32xf32>
    %c0_2 = arith.constant 0 : index
    %c0_3 = arith.constant 0 : index
    %4 = vector.load %arg3[%c0_2, %c0_3] : memref<16x128xbf16, #tpu.memory_space<vmem>>, vector<16x128xbf16>
    %c0_4 = arith.constant 0 : index
    %c0_5 = arith.constant 0 : index
    %5 = vector.load %arg4[%c0_4, %c0_5] : memref<128x32xbf16, #tpu.memory_space<vmem>>, vector<128x32xbf16>
    %cst = arith.constant dense<0.000000e+00> : vector<16x32xf32>
    %6 = tpu.matmul %4, %5, %cst {dimension_numbers = #tpu.dot_dimension_numbers<[1], [0], [0], [1], [0, 0, 1, 1], [], []>} : vector<16x128xbf16>, vector<128x32xbf16>, vector<16x32xf32> -> vector<16x32xf32>
    %7 = arith.addf %3, %6 : vector<16x32xf32>
    %c0_6 = arith.constant 0 : index
    %c0_7 = arith.constant 0 : index
    %8 = vector.load %arg8[%c0_6, %c0_7] : memref<16x32xf32, #tpu.memory_space<vmem>>, vector<16x32xf32>
    tpu.vector_store %arg8[%c0_6, %c0_7], %7 {strides = array<i32>} : memref<16x32xf32, #tpu.memory_space<vmem>>, vector<16x32xf32>,
    %c0_i32_8 = arith.constant 0 : i32
    %9 = arith.cmpi eq, %arg2, %c0_i32_8 : i32
    %10 = arith.extui %9 : i1 to i32
    %c0_i32_9 = arith.constant 0 : i32
    %11 = arith.cmpi ne, %10, %c0_i32_9 : i32
    scf.if %11 {
      %c0_10 = arith.constant 0 : index
      %c0_11 = arith.constant 0 : index
      %12 = vector.load %arg8[%c0_10, %c0_11] : memref<16x32xf32, #tpu.memory_space<vmem>>, vector<16x32xf32>
      %c0_12 = arith.constant 0 : index
      %c0_13 = arith.constant 0 : index
      %13 = vector.load %arg5[%c0_12, %c0_13] : memref<1x32xf32, #tpu.memory_space<vmem>>, vector<1x32xf32>
      %14 = vector.broadcast %13 : vector<1x32xf32> to vector<16x32xf32>
      %15 = arith.addf %12, %14 : vector<16x32xf32>
      %c0_14 = arith.constant 0 : index
      %c0_15 = arith.constant 0 : index
      %16 = vector.load %arg6[%c0_14, %c0_15] : memref<16x32xbf16, #tpu.memory_space<vmem>>, vector<16x32xbf16>
      %17 = arith.extf %16 : vector<16x32xbf16> to vector<16x32xf32>
      %18 = arith.addf %15, %17 : vector<16x32xf32>
      %19 = arith.truncf %18 : vector<16x32xf32> to vector<16x32xbf16>
      %c0_16 = arith.constant 0 : index
      %c0_17 = arith.constant 0 : index
      %20 = vector.load %arg7[%c0_16, %c0_17] : memref<16x32xbf16, #tpu.memory_space<vmem>>, vector<16x32xbf16>
      tpu.vector_store %arg7[%c0_16, %c0_17], %19 {strides = array<i32>} : memref<16x32xbf16, #tpu.memory_space<vmem>>, vector<16x32xbf16>,
    } else {
    }
    return
  }
  func.func @transform_0(%arg0: i32, %arg1: i32, %arg2: i32) -> (i32, i32) {
    %c0_i32 = arith.constant 0 : i32
    return %arg0, %arg2 : i32, i32
  }
  func.func @transform_1(%arg0: i32, %arg1: i32, %arg2: i32) -> (i32, i32) {
    %c0_i32 = arith.constant 0 : i32
    return %arg2, %arg1 : i32, i32
  }
  func.func @transform_2(%arg0: i32, %arg1: i32, %arg2: i32) -> (i32, i32) {
    %c0_i32 = arith.constant 0 : i32
    %c0_i32_0 = arith.constant 0 : i32
    return %c0_i32, %arg1 : i32, i32
  }
  func.func @transform_3(%arg0: i32, %arg1: i32, %arg2: i32) -> (i32, i32) {
    %c0_i32 = arith.constant 0 : i32
    return %arg0, %arg1 : i32, i32
  }
  func.func @transform_4(%arg0: i32, %arg1: i32, %arg2: i32) -> (i32, i32) {
    %c0_i32 = arith.constant 0 : i32
    return %arg0, %arg1 : i32, i32
  }
}

module attributes {stable_mosaic.version = 11 : i64} {
  func.func @_linear_kernel(%arg0: i32, %arg1: i32, %arg2: i32, %arg3: memref<16x32xbf16, #tpu.memory_space<vmem>>, %arg4: memref<32x64xbf16, #tpu.memory_space<vmem>>, %arg5: memref<16x64xf32, #tpu.memory_space<vmem>>, %arg6: memref<16x64xf32, #tpu.memory_space<vmem>>) attributes {dimension_semantics = [#tpu.dimension_semantics<parallel>, #tpu.dimension_semantics<parallel>, #tpu.dimension_semantics<arbitrary>], iteration_bounds = array<i64: 1, 1, 1>, scalar_prefetch = 0 : i64, scratch_operands = 1 : i64, tpu.core_type = #tpu.core_type<tc>, window_params = [{transform_indices = @transform_0, window_bounds = array<i64: 16, 32>}, {transform_indices = @transform_1, window_bounds = array<i64: 32, 64>}, {transform_indices = @transform_2, window_bounds = array<i64: 16, 64>}]} {
    %c0_i32 = arith.constant 0 : i32
    %0 = arith.cmpi eq, %arg2, %c0_i32 : i32
    %1 = arith.extui %0 : i1 to i32
    %c0_i32_0 = arith.constant 0 : i32
    %2 = arith.cmpi ne, %1, %c0_i32_0 : i32
    scf.if %2 {
      %cst_10 = arith.constant 0.000000e+00 : f32
      %12 = vector.broadcast %cst_10 : f32 to vector<16x64xf32>
      %c0_11 = arith.constant 0 : index
      %c0_12 = arith.constant 0 : index
      %13 = vector.load %arg6[%c0_11, %c0_12] : memref<16x64xf32, #tpu.memory_space<vmem>>, vector<16x64xf32>
      tpu.vector_store %arg6[%c0_11, %c0_12], %12 {strides = array<i32>} : memref<16x64xf32, #tpu.memory_space<vmem>>, vector<16x64xf32>,
    } else {
    }
    %c0 = arith.constant 0 : index
    %c0_1 = arith.constant 0 : index
    %3 = vector.load %arg6[%c0, %c0_1] : memref<16x64xf32, #tpu.memory_space<vmem>>, vector<16x64xf32>
    %c0_2 = arith.constant 0 : index
    %c0_3 = arith.constant 0 : index
    %4 = vector.load %arg3[%c0_2, %c0_3] : memref<16x32xbf16, #tpu.memory_space<vmem>>, vector<16x32xbf16>
    %c0_4 = arith.constant 0 : index
    %c0_5 = arith.constant 0 : index
    %5 = vector.load %arg4[%c0_4, %c0_5] : memref<32x64xbf16, #tpu.memory_space<vmem>>, vector<32x64xbf16>
    %cst = arith.constant dense<0.000000e+00> : vector<16x64xf32>
    %6 = tpu.matmul %4, %5, %cst {dimension_numbers = #tpu.dot_dimension_numbers<[1], [0], [0], [1], [0, 0, 1, 1], [], []>} : vector<16x32xbf16>, vector<32x64xbf16>, vector<16x64xf32> -> vector<16x64xf32>
    %7 = arith.addf %3, %6 : vector<16x64xf32>
    %c0_6 = arith.constant 0 : index
    %c0_7 = arith.constant 0 : index
    %8 = vector.load %arg6[%c0_6, %c0_7] : memref<16x64xf32, #tpu.memory_space<vmem>>, vector<16x64xf32>
    tpu.vector_store %arg6[%c0_6, %c0_7], %7 {strides = array<i32>} : memref<16x64xf32, #tpu.memory_space<vmem>>, vector<16x64xf32>,
    %c0_i32_8 = arith.constant 0 : i32
    %9 = arith.cmpi eq, %arg2, %c0_i32_8 : i32
    %10 = arith.extui %9 : i1 to i32
    %c0_i32_9 = arith.constant 0 : i32
    %11 = arith.cmpi ne, %10, %c0_i32_9 : i32
    scf.if %11 {
      %c0_10 = arith.constant 0 : index
      %c0_11 = arith.constant 0 : index
      %12 = vector.load %arg6[%c0_10, %c0_11] : memref<16x64xf32, #tpu.memory_space<vmem>>, vector<16x64xf32>
      %c0_12 = arith.constant 0 : index
      %c0_13 = arith.constant 0 : index
      %13 = vector.load %arg5[%c0_12, %c0_13] : memref<16x64xf32, #tpu.memory_space<vmem>>, vector<16x64xf32>
      tpu.vector_store %arg5[%c0_12, %c0_13], %12 {strides = array<i32>} : memref<16x64xf32, #tpu.memory_space<vmem>>, vector<16x64xf32>,
    } else {
    }
    return
  }
  func.func @transform_0(%arg0: i32, %arg1: i32, %arg2: i32) -> (i32, i32) {
    %c0_i32 = arith.constant 0 : i32
    return %arg0, %arg2 : i32, i32
  }
  func.func @transform_1(%arg0: i32, %arg1: i32, %arg2: i32) -> (i32, i32) {
    %c0_i32 = arith.constant 0 : i32
    return %arg2, %arg1 : i32, i32
  }
  func.func @transform_2(%arg0: i32, %arg1: i32, %arg2: i32) -> (i32, i32) {
    %c0_i32 = arith.constant 0 : i32
    return %arg0, %arg1 : i32, i32
  }
}

module attributes {stable_mosaic.version = 11 : i64} {
  func.func @_linear_kernel(%arg0: i32, %arg1: i32, %arg2: i32, %arg3: memref<16x32xbf16, #tpu.memory_space<vmem>>, %arg4: memref<32x128xbf16, #tpu.memory_space<vmem>>, %arg5: memref<1x128xf32, #tpu.memory_space<vmem>>, %arg6: memref<16x128xbf16, #tpu.memory_space<vmem>>, %arg7: memref<16x128xf32, #tpu.memory_space<vmem>>) attributes {dimension_semantics = [#tpu.dimension_semantics<parallel>, #tpu.dimension_semantics<parallel>, #tpu.dimension_semantics<arbitrary>], iteration_bounds = array<i64: 1, 1, 1>, scalar_prefetch = 0 : i64, scratch_operands = 1 : i64, tpu.core_type = #tpu.core_type<tc>, window_params = [{transform_indices = @transform_0, window_bounds = array<i64: 16, 32>}, {transform_indices = @transform_1, window_bounds = array<i64: 32, 128>}, {transform_indices = @transform_2, window_bounds = array<i64: 1, 128>}, {transform_indices = @transform_3, window_bounds = array<i64: 16, 128>}]} {
    %c0_i32 = arith.constant 0 : i32
    %0 = arith.cmpi eq, %arg2, %c0_i32 : i32
    %1 = arith.extui %0 : i1 to i32
    %c0_i32_0 = arith.constant 0 : i32
    %2 = arith.cmpi ne, %1, %c0_i32_0 : i32
    scf.if %2 {
      %cst_10 = arith.constant 0.000000e+00 : f32
      %12 = vector.broadcast %cst_10 : f32 to vector<16x128xf32>
      %c0_11 = arith.constant 0 : index
      %c0_12 = arith.constant 0 : index
      %13 = vector.load %arg7[%c0_11, %c0_12] : memref<16x128xf32, #tpu.memory_space<vmem>>, vector<16x128xf32>
      tpu.vector_store %arg7[%c0_11, %c0_12], %12 {strides = array<i32>} : memref<16x128xf32, #tpu.memory_space<vmem>>, vector<16x128xf32>,
    } else {
    }
    %c0 = arith.constant 0 : index
    %c0_1 = arith.constant 0 : index
    %3 = vector.load %arg7[%c0, %c0_1] : memref<16x128xf32, #tpu.memory_space<vmem>>, vector<16x128xf32>
    %c0_2 = arith.constant 0 : index
    %c0_3 = arith.constant 0 : index
    %4 = vector.load %arg3[%c0_2, %c0_3] : memref<16x32xbf16, #tpu.memory_space<vmem>>, vector<16x32xbf16>
    %c0_4 = arith.constant 0 : index
    %c0_5 = arith.constant 0 : index
    %5 = vector.load %arg4[%c0_4, %c0_5] : memref<32x128xbf16, #tpu.memory_space<vmem>>, vector<32x128xbf16>
    %cst = arith.constant dense<0.000000e+00> : vector<16x128xf32>
    %6 = tpu.matmul %4, %5, %cst {dimension_numbers = #tpu.dot_dimension_numbers<[1], [0], [0], [1], [0, 0, 1, 1], [], []>} : vector<16x32xbf16>, vector<32x128xbf16>, vector<16x128xf32> -> vector<16x128xf32>
    %7 = arith.addf %3, %6 : vector<16x128xf32>
    %c0_6 = arith.constant 0 : index
    %c0_7 = arith.constant 0 : index
    %8 = vector.load %arg7[%c0_6, %c0_7] : memref<16x128xf32, #tpu.memory_space<vmem>>, vector<16x128xf32>
    tpu.vector_store %arg7[%c0_6, %c0_7], %7 {strides = array<i32>} : memref<16x128xf32, #tpu.memory_space<vmem>>, vector<16x128xf32>,
    %c0_i32_8 = arith.constant 0 : i32
    %9 = arith.cmpi eq, %arg2, %c0_i32_8 : i32
    %10 = arith.extui %9 : i1 to i32
    %c0_i32_9 = arith.constant 0 : i32
    %11 = arith.cmpi ne, %10, %c0_i32_9 : i32
    scf.if %11 {
      %c0_10 = arith.constant 0 : index
      %c0_11 = arith.constant 0 : index
      %12 = vector.load %arg7[%c0_10, %c0_11] : memref<16x128xf32, #tpu.memory_space<vmem>>, vector<16x128xf32>
      %c0_12 = arith.constant 0 : index
      %c0_13 = arith.constant 0 : index
      %13 = vector.load %arg5[%c0_12, %c0_13] : memref<1x128xf32, #tpu.memory_space<vmem>>, vector<1x128xf32>
      %14 = vector.broadcast %13 : vector<1x128xf32> to vector<16x128xf32>
      %15 = arith.addf %12, %14 : vector<16x128xf32>
      %cst_14 = arith.constant 5.000000e-01 : f32
      %16 = vector.broadcast %cst_14 : f32 to vector<16x128xf32>
      %17 = arith.mulf %16, %15 : vector<16x128xf32>
      %cst_15 = arith.constant 0.707106769 : f32
      %18 = vector.broadcast %cst_15 : f32 to vector<16x128xf32>
      %19 = arith.mulf %15, %18 : vector<16x128xf32>
      %cst_16 = arith.constant 0.000000e+00 : f32
      %20 = vector.broadcast %cst_16 : f32 to vector<16x128xf32>
      %21 = arith.cmpf olt, %19, %20 : vector<16x128xf32>
      %cst_17 = arith.constant -1.000000e+00 : f32
      %cst_18 = arith.constant 1.000000e+00 : f32
      %22 = vector.broadcast %cst_17 : f32 to vector<16x128xf32>
      %23 = vector.broadcast %cst_18 : f32 to vector<16x128xf32>
      %24 = arith.select %21, %22, %23 : vector<16x128xi1>, vector<16x128xf32>
      %25 = math.absf %19 : vector<16x128xf32>
      %cst_19 = arith.constant 0.327591091 : f32
      %26 = vector.broadcast %cst_19 : f32 to vector<16x128xf32>
      %27 = arith.mulf %26, %25 : vector<16x128xf32>
      %cst_20 = arith.constant 1.000000e+00 : f32
      %28 = vector.broadcast %cst_20 : f32 to vector<16x128xf32>
      %29 = arith.addf %28, %27 : vector<16x128xf32>
      %cst_21 = arith.constant 1.000000e+00 : f32
      %30 = vector.broadcast %cst_21 : f32 to vector<16x128xf32>
      %31 = arith.divf %30, %29 : vector<16x128xf32>
      %cst_22 = arith.constant 1.06140542 : f32
      %32 = vector.broadcast %cst_22 : f32 to vector<16x128xf32>
      %33 = arith.mulf %32, %31 : vector<16x128xf32>
      %cst_23 = arith.constant -1.45315206 : f32
      %34 = vector.broadcast %cst_23 : f32 to vector<16x128xf32>
      %35 = arith.addf %33, %34 : vector<16x128xf32>
      %36 = arith.mulf %35, %31 : vector<16x128xf32>
      %cst_24 = arith.constant 1.42141378 : f32
      %37 = vector.broadcast %cst_24 : f32 to vector<16x128xf32>
      %38 = arith.addf %36, %37 : vector<16x128xf32>
      %39 = arith.mulf %38, %31 : vector<16x128xf32>
      %cst_25 = arith.constant -0.284496725 : f32
      %40 = vector.broadcast %cst_25 : f32 to vector<16x128xf32>
      %41 = arith.addf %39, %40 : vector<16x128xf32>
      %42 = arith.mulf %41, %31 : vector<16x128xf32>
      %cst_26 = arith.constant 0.254829586 : f32
      %43 = vector.broadcast %cst_26 : f32 to vector<16x128xf32>
      %44 = arith.addf %42, %43 : vector<16x128xf32>
      %45 = arith.mulf %44, %31 : vector<16x128xf32>
      %cst_27 = arith.constant 0.000000e+00 : f32
      %46 = vector.broadcast %cst_27 : f32 to vector<16x128xf32>
      %47 = arith.subf %46, %25 : vector<16x128xf32>
      %48 = arith.mulf %47, %25 : vector<16x128xf32>
      %49 = math.exp %48 : vector<16x128xf32>
      %50 = arith.mulf %45, %49 : vector<16x128xf32>
      %cst_28 = arith.constant 1.000000e+00 : f32
      %51 = vector.broadcast %cst_28 : f32 to vector<16x128xf32>
      %52 = arith.subf %51, %50 : vector<16x128xf32>
      %53 = arith.mulf %24, %52 : vector<16x128xf32>
      %cst_29 = arith.constant 1.000000e+00 : f32
      %54 = vector.broadcast %cst_29 : f32 to vector<16x128xf32>
      %55 = arith.addf %54, %53 : vector<16x128xf32>
      %56 = arith.mulf %17, %55 : vector<16x128xf32>
      %57 = arith.truncf %56 : vector<16x128xf32> to vector<16x128xbf16>
      %c0_30 = arith.constant 0 : index
      %c0_31 = arith.constant 0 : index
      %58 = vector.load %arg6[%c0_30, %c0_31] : memref<16x128xbf16, #tpu.memory_space<vmem>>, vector<16x128xbf16>
      tpu.vector_store %arg6[%c0_30, %c0_31], %57 {strides = array<i32>} : memref<16x128xbf16, #tpu.memory_space<vmem>>, vector<16x128xbf16>,
    } else {
    }
    return
  }
  func.func @transform_0(%arg0: i32, %arg1: i32, %arg2: i32) -> (i32, i32) {
    %c0_i32 = arith.constant 0 : i32
    return %arg0, %arg2 : i32, i32
  }
  func.func @transform_1(%arg0: i32, %arg1: i32, %arg2: i32) -> (i32, i32) {
    %c0_i32 = arith.constant 0 : i32
    return %arg2, %arg1 : i32, i32
  }
  func.func @transform_2(%arg0: i32, %arg1: i32, %arg2: i32) -> (i32, i32) {
    %c0_i32 = arith.constant 0 : i32
    %c0_i32_0 = arith.constant 0 : i32
    return %c0_i32, %arg1 : i32, i32
  }
  func.func @transform_3(%arg0: i32, %arg1: i32, %arg2: i32) -> (i32, i32) {
    %c0_i32 = arith.constant 0 : i32
    return %arg0, %arg1 : i32, i32
  }
}

</mosaic_0001>

<llo_original>
// kernel: gpt_forward.17
$region0: #{gpt_forward.17}
  #allocation0 [shape = 'u32[]', space=smem, size = 0x4, offset = 0x4, fixed_abs, tag = 'smem constant byte address 0x4 - core index']
  #allocation1 [shape = 'u32[144,128]{1,0:T(1,128)}', space=vmem, size = 0x12000, scoped, tag = 'internal scratch']
  #allocation2 [shape = 'f32[16,96]{1,0:T(8,128)}', space=vmem, size = 0x2000, scoped, tag = 'scratch operand']
  %s0 = inlined_call_operand.vmem [shape: bf16[16,32], index: 0, kind: input, shape index: {}]
  %s1 = inlined_call_operand.vmem [shape: bf16[32,96], index: 1, kind: input, shape index: {}]
  %s2 = inlined_call_operand.vmem [shape: f32[1,96], index: 2, kind: input, shape index: {}]
  %s3 = inlined_call_operand.vmem [shape: bf16[16,96], index: 3, kind: output, shape index: {}]
  %s4 = sld [smem:[#allocation0]]
  $region30: #{gpt_forward.17} parent=0
    _
  %s6 = ssub.s32 1, %s4
  %s7 = scalar_select 0, %s6, %s4
  // Predicated region
  $region2: #{gpt_forward.17} parent=0 // pred_check
    _
  $region3: #{gpt_forward.17} parent=0 // pred_check_branch
    %9 = sbr.rel (0) target = $region5
  $region4: #{gpt_forward.17} parent=0 // pred_region
    _
  $region5: #{gpt_forward.17} parent=0 // pred_fallthru
    _
  // Predicated region
  $region6: #{gpt_forward.17} parent=0 // pred_check
    _
  $region7: #{gpt_forward.17} parent=0 // pred_check_branch
    %11 = sbr.rel (0) target = $region9
  $region8: #{gpt_forward.17} parent=0 // pred_region
    _
  $region9: #{gpt_forward.17} parent=0 // pred_fallthru
    _
  // Predicated region
  $region10: #{gpt_forward.17} parent=0 // pred_check
    _
  $region11: #{gpt_forward.17} parent=0 // pred_check_branch
    %13 = sbr.rel (0) target = $region13
  $region12: #{gpt_forward.17} parent=0 // pred_region
    _
  $region13: #{gpt_forward.17} parent=0 // pred_fallthru
    _
  %p15 = scmp.eq.s32.totalorder 0, 0
  // Predicated region
  $region14: #{gpt_forward.17} parent=0 // pred_check
    %p16 = pneg %p15
  $region15: #{gpt_forward.17} parent=0 // pred_check_branch
    %18 = sbr.rel (%p16) target = $region17
  $region16: #{gpt_forward.17} parent=0 // pred_region
    %vm19 = vcmask 785408
    %20 = vst.msk [vmem:[#allocation2] sm:$0xff] %vm19, 0.0
    %21 = vst.msk [vmem:[#allocation2 + $0x8] sm:$0xff] %vm19, 0.0
  $region17: #{gpt_forward.17} parent=0 // pred_fallthru
    _
  %v22 = vld [vmem:[#allocation2] sm:$0xff]
  %v23 = vld [vmem:[#allocation2 + $0x8] sm:$0xff]
  %v24 = vld [vmem:[%s0] sm:$0xf]
  %v25 = vld [vmem:[%s0 + $0x4] sm:$0xf]
  %v26 = vld [vmem:[%s1] sm:$0xf]
  %v27 = vld [vmem:[%s1 + $0x4] sm:$0xf]
  %v28 = vld [vmem:[%s1 + $0x8] sm:$0xf]
  %v29 = vld [vmem:[%s1 + $0xc] sm:$0xf]
  %v32 = vunpack.c.l.b16 %v24
  %v33 = vunpack.c.l.b16 %v25
  %v34 = vpack.c.b16 %v33, %v32
  %v39 = vunpack.c.l.b16 %v26
  %v40 = vunpack.c.l.b16 %v27
  %v41 = vunpack.c.l.b16 %v28
  %v42 = vunpack.c.l.b16 %v29
  %v43 = vpack.c.b16 %v40, %v39
  %v44 = vpack.c.b16 %v42, %v41
  %vm47 = vcmask 261120
  %v49 = vsel %vm47, %v34, 0
  %51 = vmatprep.subr.bf16.mxu0 0
  %52 = vmatpush1.bf16.msra.mxu0 %v43
  %53 = vmatprep.subr.bf16.mxu0 0
  %54 = vmatpush1.bf16.msra.mxu0 %v44
  %55 = vmatprep.subr.bf16.mxu0 0
  %56 = vmatpush1.bf16.msra.mxu0 0
  %57 = vmatprep.subr.bf16.mxu0 0
  %58 = vmatpush1.bf16.msra.mxu0 0
  %59 = vmatprep.subr.bf16.mxu0 0
  %60 = vmatpush1.bf16.msra.mxu0 0
  %61 = vmatprep.subr.bf16.mxu0 0
  %62 = vmatpush1.bf16.msra.mxu0 0
  %63 = vmatprep.subr.bf16.mxu0 0
  %64 = vmatpush1.bf16.msra.mxu0 0
  %65 = vmatprep.subr.bf16.mxu0 0
  %66 = vmatpush1.bf16.msra.mxu0 0
  %67 = vmatprep.subr.bf16.mxu0 0
  %68 = vmatpush1.bf16.msra.mxu0 0
  %69 = vmatprep.subr.bf16.mxu0 0
  %70 = vmatpush1.bf16.msra.mxu0 0
  %71 = vmatprep.subr.bf16.mxu0 0
  %72 = vmatpush1.bf16.msra.mxu0 0
  %73 = vmatprep.subr.bf16.mxu0 0
  %74 = vmatpush1.bf16.msra.mxu0 0
  %75 = vmatprep.subr.bf16.mxu0 0
  %76 = vmatpush1.bf16.msra.mxu0 0
  %77 = vmatprep.subr.bf16.mxu0 0
  %78 = vmatpush1.bf16.msra.mxu0 0
  %79 = vmatprep.subr.bf16.mxu0 0
  %80 = vmatpush1.bf16.msra.mxu0 0
  %81 = vmatprep.subr.bf16.mxu0 0
  %82 = vmatpush1.bf16.msra.mxu0 0
  %83 = vmatprep.mubr.bf16.mxu0 0
  %84 = vmatmul.mubr.bf16.gmra.mrb[0].mxu0 %v49
  %v85 = vpop.f32.mrb[0].mxu0
  %v86 = vadd.f32 0.0, %v85
  %v87 = vpop.f32.mrb[0].mxu0
  %v88 = vpop.f32.mrb[0].mxu0
  %v89 = vadd.f32 0.0, %v88
  %v90 = vpop.f32.mrb[0].mxu0
  %91 = vdwg.mxu0
  %v92 = vadd.f32 %v22, %v86
  %v93 = vadd.f32 %v23, %v89
  %vm94 = vcmask 785408
  %95 = vst.msk [vmem:[#allocation2] sm:$0xff] %vm94, %v92
  %96 = vst.msk [vmem:[#allocation2 + $0x8] sm:$0xff] %vm94, %v93
  // Predicated region
  $region18: #{gpt_forward.17} parent=0 // pred_check
    %p97 = pneg %p15
  $region19: #{gpt_forward.17} parent=0 // pred_check_branch
    %99 = sbr.rel (%p97) target = $region21
  $region20: #{gpt_forward.17} parent=0 // pred_region
    %v100 = vld [vmem:[#allocation2] sm:$0xff]
    %v101 = vld [vmem:[#allocation2 + $0x8] sm:$0xff]
    %v102 = vld [vmem:[%s2] sm:$0x1]
    %v104 = vlaneseq
    %v105 = vshrl.u32 %v104, 7
    %v106 = vsub.s32 0, %v105
    %v107 = vrot.slane %v102, %v106
    %v109 = vadd.f32 %v100, %v107
    %v110 = vadd.f32 %v101, %v107
    %v111 = vpack.c.bf16 %v110, %v109
    %v113 = vunpack.c.l.b16 %v111
    %v114 = vunpack.c.h.b16 %v111
    %v115 = vpack.c.b16 %v113, %v113
    %v116 = vpack.c.b16 %v114, %v114
    %vm119 = vcmask 781312
    %120 = vst.msk [vmem:[%s3] sm:$0xf] %vm119, %v115
    %121 = vst.msk [vmem:[%s3 + $0x4] sm:$0xf] %vm119, %v116
  $region21: #{gpt_forward.17} parent=0 // pred_fallthru
    _
  // Predicated region
  $region22: #{gpt_forward.17} parent=0 // pred_check
    _
  $region23: #{gpt_forward.17} parent=0 // pred_check_branch
    %123 = sbr.rel (0) target = $region25
  $region24: #{gpt_forward.17} parent=0 // pred_region
    _
  $region25: #{gpt_forward.17} parent=0 // pred_fallthru
    _
  // Predicated region
  $region26: #{gpt_forward.17} parent=0 // pred_check
    _
  $region27: #{gpt_forward.17} parent=0 // pred_check_branch
    %125 = sbr.rel (0) target = $region29
  $region28: #{gpt_forward.17} parent=0 // pred_region
    _
  $region29: #{gpt_forward.17} parent=0 // pred_fallthru
    _

// kernel: gpt_forward.19
$region0: #{gpt_forward.19}
  #allocation0 [shape = 'u32[]', space=smem, size = 0x4, offset = 0x4, fixed_abs, tag = 'smem constant byte address 0x4 - core index']
  #allocation1 [shape = 'u32[144,128]{1,0:T(1,128)}', space=vmem, size = 0x12000, scoped, tag = 'internal scratch']
  #allocation2 [shape = 'f32[16,32]{1,0:T(8,128)}', space=vmem, size = 0x2000, scoped, tag = 'scratch operand']
  %s0 = inlined_call_operand.vmem [shape: bf16[16,32], index: 0, kind: input, shape index: {}]
  %s1 = inlined_call_operand.vmem [shape: bf16[32,32], index: 1, kind: input, shape index: {}]
  %s2 = inlined_call_operand.vmem [shape: f32[1,32], index: 2, kind: input, shape index: {}]
  %s3 = inlined_call_operand.vmem [shape: bf16[16,32], index: 3, kind: input, shape index: {}]
  %s4 = inlined_call_operand.vmem [shape: bf16[16,32], index: 4, kind: output, shape index: {}]
  %s5 = sld [smem:[#allocation0]]
  $region34: #{gpt_forward.19} parent=0
    _
  %s7 = ssub.s32 1, %s5
  %s8 = scalar_select 0, %s7, %s5
  // Predicated region
  $region2: #{gpt_forward.19} parent=0 // pred_check
    _
  $region3: #{gpt_forward.19} parent=0 // pred_check_branch
    %10 = sbr.rel (0) target = $region5
  $region4: #{gpt_forward.19} parent=0 // pred_region
    _
  $region5: #{gpt_forward.19} parent=0 // pred_fallthru
    _
  // Predicated region
  $region6: #{gpt_forward.19} parent=0 // pred_check
    _
  $region7: #{gpt_forward.19} parent=0 // pred_check_branch
    %12 = sbr.rel (0) target = $region9
  $region8: #{gpt_forward.19} parent=0 // pred_region
    _
  $region9: #{gpt_forward.19} parent=0 // pred_fallthru
    _
  // Predicated region
  $region10: #{gpt_forward.19} parent=0 // pred_check
    _
  $region11: #{gpt_forward.19} parent=0 // pred_check_branch
    %14 = sbr.rel (0) target = $region13
  $region12: #{gpt_forward.19} parent=0 // pred_region
    _
  $region13: #{gpt_forward.19} parent=0 // pred_fallthru
    _
  // Predicated region
  $region14: #{gpt_forward.19} parent=0 // pred_check
    _
  $region15: #{gpt_forward.19} parent=0 // pred_check_branch
    %16 = sbr.rel (0) target = $region17
  $region16: #{gpt_forward.19} parent=0 // pred_region
    _
  $region17: #{gpt_forward.19} parent=0 // pred_fallthru
    _
  %p18 = scmp.eq.s32.totalorder 0, 0
  // Predicated region
  $region18: #{gpt_forward.19} parent=0 // pred_check
    %p19 = pneg %p18
  $region19: #{gpt_forward.19} parent=0 // pred_check_branch
    %21 = sbr.rel (%p19) target = $region21
  $region20: #{gpt_forward.19} parent=0 // pred_region
    %vm22 = vcmask 261120
    %23 = vst.msk [vmem:[#allocation2] sm:$0xff] %vm22, 0.0
    %24 = vst.msk [vmem:[#allocation2 + $0x8] sm:$0xff] %vm22, 0.0
  $region21: #{gpt_forward.19} parent=0 // pred_fallthru
    _
  %v25 = vld [vmem:[#allocation2] sm:$0xff]
  %v26 = vld [vmem:[#allocation2 + $0x8] sm:$0xff]
  %v27 = vld [vmem:[%s0] sm:$0xf]
  %v28 = vld [vmem:[%s0 + $0x4] sm:$0xf]
  %v29 = vld [vmem:[%s1] sm:$0xf]
  %v30 = vld [vmem:[%s1 + $0x4] sm:$0xf]
  %v31 = vld [vmem:[%s1 + $0x8] sm:$0xf]
  %v32 = vld [vmem:[%s1 + $0xc] sm:$0xf]
  %v35 = vunpack.c.l.b16 %v27
  %v36 = vunpack.c.l.b16 %v28
  %v37 = vpack.c.b16 %v36, %v35
  %v42 = vunpack.c.l.b16 %v29
  %v43 = vunpack.c.l.b16 %v30
  %v44 = vunpack.c.l.b16 %v31
  %v45 = vunpack.c.l.b16 %v32
  %v46 = vpack.c.b16 %v43, %v42
  %v47 = vpack.c.b16 %v45, %v44
  %vm50 = vcmask 261120
  %v52 = vsel %vm50, %v37, 0
  %54 = vmatprep.subr.bf16.mxu0 0
  %55 = vmatpush1.bf16.msra.mxu0 %v46
  %56 = vmatprep.subr.bf16.mxu0 0
  %57 = vmatpush1.bf16.msra.mxu0 %v47
  %58 = vmatprep.subr.bf16.mxu0 0
  %59 = vmatpush1.bf16.msra.mxu0 0
  %60 = vmatprep.subr.bf16.mxu0 0
  %61 = vmatpush1.bf16.msra.mxu0 0
  %62 = vmatprep.subr.bf16.mxu0 0
  %63 = vmatpush1.bf16.msra.mxu0 0
  %64 = vmatprep.subr.bf16.mxu0 0
  %65 = vmatpush1.bf16.msra.mxu0 0
  %66 = vmatprep.subr.bf16.mxu0 0
  %67 = vmatpush1.bf16.msra.mxu0 0
  %68 = vmatprep.subr.bf16.mxu0 0
  %69 = vmatpush1.bf16.msra.mxu0 0
  %70 = vmatprep.subr.bf16.mxu0 0
  %71 = vmatpush1.bf16.msra.mxu0 0
  %72 = vmatprep.subr.bf16.mxu0 0
  %73 = vmatpush1.bf16.msra.mxu0 0
  %74 = vmatprep.subr.bf16.mxu0 0
  %75 = vmatpush1.bf16.msra.mxu0 0
  %76 = vmatprep.subr.bf16.mxu0 0
  %77 = vmatpush1.bf16.msra.mxu0 0
  %78 = vmatprep.subr.bf16.mxu0 0
  %79 = vmatpush1.bf16.msra.mxu0 0
  %80 = vmatprep.subr.bf16.mxu0 0
  %81 = vmatpush1.bf16.msra.mxu0 0
  %82 = vmatprep.subr.bf16.mxu0 0
  %83 = vmatpush1.bf16.msra.mxu0 0
  %84 = vmatprep.subr.bf16.mxu0 0
  %85 = vmatpush1.bf16.msra.mxu0 0
  %86 = vmatprep.mubr.bf16.mxu0 0
  %87 = vmatmul.mubr.bf16.gmra.mrb[0].mxu0 %v52
  %v88 = vpop.f32.mrb[0].mxu0
  %v89 = vadd.f32 0.0, %v88
  %v90 = vpop.f32.mrb[0].mxu0
  %v91 = vpop.f32.mrb[0].mxu0
  %v92 = vadd.f32 0.0, %v91
  %v93 = vpop.f32.mrb[0].mxu0
  %94 = vdwg.mxu0
  %v95 = vadd.f32 %v25, %v89
  %v96 = vadd.f32 %v26, %v92
  %97 = vst.msk [vmem:[#allocation2] sm:$0xff] %vm50, %v95
  %98 = vst.msk [vmem:[#allocation2 + $0x8] sm:$0xff] %vm50, %v96
  // Predicated region
  $region22: #{gpt_forward.19} parent=0 // pred_check
    %p99 = pneg %p18
  $region23: #{gpt_forward.19} parent=0 // pred_check_branch
    %101 = sbr.rel (%p99) target = $region25
  $region24: #{gpt_forward.19} parent=0 // pred_region
    %v102 = vld [vmem:[#allocation2] sm:$0xff]
    %v103 = vld [vmem:[#allocation2 + $0x8] sm:$0xff]
    %v104 = vld [vmem:[%s2] sm:$0x1]
    %v106 = vlaneseq
    %v107 = vshrl.u32 %v106, 7
    %v108 = vsub.s32 0, %v107
    %v109 = vrot.slane %v104, %v108
    %v111 = vadd.f32 %v102, %v109
    %v112 = vadd.f32 %v103, %v109
    %v113 = vld [vmem:[%s3] sm:$0xf]
    %v114 = vld [vmem:[%s3 + $0x4] sm:$0xf]
    %v115 = vunpack.c.l.bf16 %v113
    %v116 = vunpack.c.l.bf16 %v114
    %v117 = vadd.f32 %v111, %v115
    %v118 = vadd.f32 %v112, %v116
    %v119 = vpack.c.bf16 %v118, %v117
    %v121 = vunpack.c.l.b16 %v119
    %v122 = vunpack.c.h.b16 %v119
    %v123 = vpack.c.b16 %v121, %v121
    %v124 = vpack.c.b16 %v122, %v122
    %vm127 = vcmask 257024
    %128 = vst.msk [vmem:[%s4] sm:$0xf] %vm127, %v123
    %129 = vst.msk [vmem:[%s4 + $0x4] sm:$0xf] %vm127, %v124
  $region25: #{gpt_forward.19} parent=0 // pred_fallthru
    _
  // Predicated region
  $region26: #{gpt_forward.19} parent=0 // pred_check
    _
  $region27: #{gpt_forward.19} parent=0 // pred_check_branch
    %131 = sbr.rel (0) target = $region29
  $region28: #{gpt_forward.19} parent=0 // pred_region
    _
  $region29: #{gpt_forward.19} parent=0 // pred_fallthru
    _
  // Predicated region
  $region30: #{gpt_forward.19} parent=0 // pred_check
    _
  $region31: #{gpt_forward.19} parent=0 // pred_check_branch
    %133 = sbr.rel (0) target = $region33
  $region32: #{gpt_forward.19} parent=0 // pred_region
    _
  $region33: #{gpt_forward.19} parent=0 // pred_fallthru
    _

// kernel: gpt_forward.16
$region0: #{gpt_forward.16}
  #allocation0 [shape = 'u32[]', space=smem, size = 0x4, offset = 0x4, fixed_abs, tag = 'smem constant byte address 0x4 - core index']
  #allocation1 [shape = 'u32[144,128]{1,0:T(1,128)}', space=vmem, size = 0x12000, scoped, tag = 'internal scratch']
  %s0 = inlined_call_operand.vmem [shape: bf16[16,32], index: 0, kind: input, shape index: {}]
  %s1 = inlined_call_operand.vmem [shape: f32[1,32], index: 1, kind: input, shape index: {}]
  %s2 = inlined_call_operand.vmem [shape: f32[1,32], index: 2, kind: input, shape index: {}]
  %s3 = inlined_call_operand.vmem [shape: bf16[16,32], index: 3, kind: output, shape index: {}]
  %s4 = sld [smem:[#allocation0]]
  $region22: #{gpt_forward.16} parent=0
    _
  %s6 = ssub.s32 1, %s4
  %s7 = scalar_select 0, %s6, %s4
  // Predicated region
  $region2: #{gpt_forward.16} parent=0 // pred_check
    _
  $region3: #{gpt_forward.16} parent=0 // pred_check_branch
    %9 = sbr.rel (0) target = $region5
  $region4: #{gpt_forward.16} parent=0 // pred_region
    _
  $region5: #{gpt_forward.16} parent=0 // pred_fallthru
    _
  // Predicated region
  $region6: #{gpt_forward.16} parent=0 // pred_check
    _
  $region7: #{gpt_forward.16} parent=0 // pred_check_branch
    %11 = sbr.rel (0) target = $region9
  $region8: #{gpt_forward.16} parent=0 // pred_region
    _
  $region9: #{gpt_forward.16} parent=0 // pred_fallthru
    _
  // Predicated region
  $region10: #{gpt_forward.16} parent=0 // pred_check
    _
  $region11: #{gpt_forward.16} parent=0 // pred_check_branch
    %13 = sbr.rel (0) target = $region13
  $region12: #{gpt_forward.16} parent=0 // pred_region
    _
  $region13: #{gpt_forward.16} parent=0 // pred_fallthru
    _
  %v14 = vld [vmem:[%s0] sm:$0xf]
  %v15 = vld [vmem:[%s0 + $0x4] sm:$0xf]
  %v16 = vunpack.c.l.bf16 %v14
  %v17 = vunpack.c.l.bf16 %v15
  %vm18 = vcmask 261120
  %v19 = vsel %vm18, %v16, 0.0
  %20 = vadd.xlane.f32.xlu0 %v19
  %v21 = vpop.xlane.xlu0 %20
  %v22 = vsel %vm18, %v17, 0.0
  %23 = vadd.xlane.f32.xlu0 %v22
  %v24 = vpop.xlane.xlu0 %23
  %v25 = vrcp.pop 32.0
  %v26 = vmul.f32 %v21, %v25
  %v27 = vmul.f32 %v24, %v25
  %v28 = vsub.f32 %v16, %v26
  %v29 = vsub.f32 %v17, %v27
  %v30 = vmul.f32 %v28, %v28
  %v31 = vmul.f32 %v29, %v29
  %v32 = vsel %vm18, %v30, 0.0
  %33 = vadd.xlane.f32.xlu0 %v32
  %v34 = vpop.xlane.xlu0 %33
  %v35 = vsel %vm18, %v31, 0.0
  %36 = vadd.xlane.f32.xlu0 %v35
  %v37 = vpop.xlane.xlu0 %36
  %v38 = vmul.f32 %v34, %v25
  %v39 = vmul.f32 %v37, %v25
  %v40 = vadd.f32 %v38, 1e-05
  %v41 = vadd.f32 %v39, 1e-05
  %v42 = vrsqrt.pop %v40
  %v43 = vrsqrt.pop %v41
  %v44 = vmul.f32 %v28, %v42
  %v45 = vmul.f32 %v29, %v43
  %v46 = vld [vmem:[%s1] sm:$0x1]
  %v48 = vlaneseq
  %v49 = vshrl.u32 %v48, 7
  %v50 = vsub.s32 0, %v49
  %v51 = vrot.slane %v46, %v50
  %v53 = vmul.f32 %v44, %v51
  %v54 = vmul.f32 %v45, %v51
  %v55 = vld [vmem:[%s2] sm:$0x1]
  %v57 = vlaneseq
  %v58 = vshrl.u32 %v57, 7
  %v59 = vsub.s32 0, %v58
  %v60 = vrot.slane %v55, %v59
  %v62 = vadd.f32 %v53, %v60
  %v63 = vadd.f32 %v54, %v60
  %v64 = vpack.c.bf16 %v63, %v62
  %v66 = vunpack.c.l.b16 %v64
  %v67 = vunpack.c.h.b16 %v64
  %v68 = vpack.c.b16 %v66, %v66
  %v69 = vpack.c.b16 %v67, %v67
  %vm72 = vcmask 257024
  %73 = vst.msk [vmem:[%s3] sm:$0xf] %vm72, %v68
  %74 = vst.msk [vmem:[%s3 + $0x4] sm:$0xf] %vm72, %v69
  // Predicated region
  $region14: #{gpt_forward.16} parent=0 // pred_check
    _
  $region15: #{gpt_forward.16} parent=0 // pred_check_branch
    %76 = sbr.rel (0) target = $region17
  $region16: #{gpt_forward.16} parent=0 // pred_region
    _
  $region17: #{gpt_forward.16} parent=0 // pred_fallthru
    _
  // Predicated region
  $region18: #{gpt_forward.16} parent=0 // pred_check
    _
  $region19: #{gpt_forward.16} parent=0 // pred_check_branch
    %78 = sbr.rel (0) target = $region21
  $region20: #{gpt_forward.16} parent=0 // pred_region
    _
  $region21: #{gpt_forward.16} parent=0 // pred_fallthru
    _

// kernel: gpt_forward.18
$region0: #{gpt_forward.18}
  #allocation0 [shape = 'u32[]', space=smem, size = 0x4, offset = 0x4, fixed_abs, tag = 'smem constant byte address 0x4 - core index']
  #allocation1 [shape = 'u32[144,128]{1,0:T(1,128)}', space=vmem, size = 0x12000, scoped, tag = 'internal scratch']
  #allocation2 [shape = 'f32[8,32]{1,0:T(8,128)}', space=vmem, size = 0x1000, scoped, tag = 'scratch operand']
  #allocation3 [shape = 'f32[8,32]{1,0:T(8,128)}', space=vmem, size = 0x1000, scoped, tag = 'scratch operand']
  #allocation4 [shape = 'f32[8,32]{1,0:T(8,128)}', space=vmem, size = 0x1000, scoped, tag = 'scratch operand']
  #allocation5 [shape = 'f32[8,32]{1,0:T(8,128)}', space=vmem, size = 0x1000, scoped, tag = 'scratch operand']
  #allocation6 [shape = 'f32[8,32]{1,0:T(8,128)}', space=vmem, size = 0x1000, scoped, tag = 'scratch operand']
  %s0 = inlined_call_operand.vmem [shape: bf16[2,8,32], index: 0, kind: input, shape index: {}]
  %s1 = inlined_call_operand.vmem [shape: bf16[2,8,32], index: 1, kind: input, shape index: {}]
  %s2 = inlined_call_operand.vmem [shape: bf16[2,8,32], index: 2, kind: input, shape index: {}]
  %s3 = inlined_call_operand.vmem [shape: bf16[2,8,32], index: 3, kind: output, shape index: {}]
  %s4 = sld [smem:[#allocation0]]
  $region71: #{gpt_forward.18} parent=0
    _
  %s6 = ssub.s32 1, %s4
  %s7 = scalar_select 0, %s6, %s4
  loop: start=0, step=1, limit=4
  $region2: #{gpt_forward.18} parent=0 // loop_pre_header
    _
  $region3: #{gpt_forward.18} parent=0 // loop_header
    %s9 = sphi 0, %s13
    %p10 = scmp.ge.s32.totalorder %s9, 4
    %s16 = sphi 0, %s42
    %s17 = sphi 0, %s38
    %s18 = sphi 0, %s34
    %s19 = sphi 0, %s30
    %s20 = sphi 0, %s16
    %s21 = sphi 0, %s17
    %s22 = sphi 0, %s18
    %s23 = sphi 0, %s19
    %s24 = sphi 0, %s20
    %s25 = sphi 0, %s21
    %s26 = sphi 0, %s22
    %s27 = sphi 0, %s23
    %s49 = sphi 0, %s51
    %s52 = sphi 0, %s49
    %s53 = sphi 0, %s52
    %s69 = sphi 0, %s53
    %s79 = sphi 0, %s81
    %s82 = sphi 0, %s79
    %s83 = sphi 0, %s82
    %s99 = sphi 0, %s83
    %s109 = sphi 0, %s111
    %s112 = sphi 0, %s109
    %s113 = sphi 0, %s112
    %s129 = sphi 0, %s113
    %s139 = sphi 0, %s141
    %s142 = sphi 0, %s139
    %s143 = sphi 0, %s142
    %s159 = sphi 0, %s143
  $region4: #{gpt_forward.18} parent=0 // loop_header_branch
    %12 = sbr.rel (%p10) target = $region8
  $region5: #{gpt_forward.18} parent=0 // loop_body
    %s14 = ssub.s32 %s9, 1
    %s15 = ssub.s32 %s9, 2
    %s28 = sadd.s32 1, %s19
    %p29 = scmp.ge.s32.totalorder %s28, 1
    %s30 = scalar_select %p29, 0, %s28
    %s31 = sadd.s32 1, %s18
    %s32 = scalar_select %p29, %s31, %s18
    %p33 = scmp.ge.s32.totalorder %s32, 1
    %s34 = scalar_select %p33, 0, %s32
    %s35 = sadd.s32 1, %s17
    %s36 = scalar_select %p33, %s35, %s17
    %p37 = scmp.ge.s32.totalorder %s36, 1
    %s38 = scalar_select %p37, 0, %s36
    %s39 = sadd.s32 1, %s16
    %s40 = scalar_select %p37, %s39, %s16
    %p41 = scmp.ge.s32.totalorder %s40, 2
    %s42 = scalar_select %p41, 0, %s40
    %s43 = ssub.s32 %s16, %s42
    %s44 = ssub.s32 %s17, %s38
    %s45 = sor.u32 %s43, %s44
    %s46 = ssub.s32 %s18, %s34
    %s47 = sor.u32 %s45, %s46
    %p48 = scmp.eq.s32.totalorder %s47, 0
    %s50 = sadd.s32 %s49, 1
    %s51 = scalar_select %p48, %s49, %s50
    %p54 = pneg %p48
    %p55 = scmp.eq.s32.totalorder %s9, 1
    %p56 = por %p54, %p55
    %p57 = scmp.ne.s32.totalorder %s49, %s52
    %p58 = scmp.eq.s32.totalorder %s9, 0
    %p59 = por %p57, %p58
    %p60 = scmp.ne.s32.totalorder %s49, %s52
    %p61 = scmp.eq.s32.totalorder %s14, 1
    %p62 = por %p60, %p61
    %p63 = scmp.ne.s32.totalorder %s52, %s53
    %p64 = scmp.eq.s32.totalorder %s14, 0
    %p65 = por %p63, %p64
    %p66 = scmp.ne.s32.totalorder %s52, %s53
    %p67 = scmp.eq.s32.totalorder %s15, 1
    %p68 = por %p66, %p67
    %p70 = scmp.ne.s32.totalorder %s53, %s69
    %p71 = scmp.eq.s32.totalorder %s15, 0
    %p72 = por %p70, %p71
    %s73 = ssub.s32 %s16, %s42
    %s74 = ssub.s32 %s19, %s30
    %s75 = sor.u32 %s73, %s74
    %s76 = ssub.s32 %s18, %s34
    %s77 = sor.u32 %s75, %s76
    %p78 = scmp.eq.s32.totalorder %s77, 0
    %s80 = sadd.s32 %s79, 1
    %s81 = scalar_select %p78, %s79, %s80
    %p84 = pneg %p78
    %p85 = scmp.eq.s32.totalorder %s9, 1
    %p86 = por %p84, %p85
    %p87 = scmp.ne.s32.totalorder %s79, %s82
    %p88 = scmp.eq.s32.totalorder %s9, 0
    %p89 = por %p87, %p88
    %p90 = scmp.ne.s32.totalorder %s79, %s82
    %p91 = scmp.eq.s32.totalorder %s14, 1
    %p92 = por %p90, %p91
    %p93 = scmp.ne.s32.totalorder %s82, %s83
    %p94 = scmp.eq.s32.totalorder %s14, 0
    %p95 = por %p93, %p94
    %p96 = scmp.ne.s32.totalorder %s82, %s83
    %p97 = scmp.eq.s32.totalorder %s15, 1
    %p98 = por %p96, %p97
    %p100 = scmp.ne.s32.totalorder %s83, %s99
    %p101 = scmp.eq.s32.totalorder %s15, 0
    %p102 = por %p100, %p101
    %s103 = ssub.s32 %s16, %s42
    %s104 = ssub.s32 %s19, %s30
    %s105 = sor.u32 %s103, %s104
    %s106 = ssub.s32 %s18, %s34
    %s107 = sor.u32 %s105, %s106
    %p108 = scmp.eq.s32.totalorder %s107, 0
    %s110 = sadd.s32 %s109, 1
    %s111 = scalar_select %p108, %s109, %s110
    %p114 = pneg %p108
    %p115 = scmp.eq.s32.totalorder %s9, 1
    %p116 = por %p114, %p115
    %p117 = scmp.ne.s32.totalorder %s109, %s112
    %p118 = scmp.eq.s32.totalorder %s9, 0
    %p119 = por %p117, %p118
    %p120 = scmp.ne.s32.totalorder %s109, %s112
    %p121 = scmp.eq.s32.totalorder %s14, 1
    %p122 = por %p120, %p121
    %p123 = scmp.ne.s32.totalorder %s112, %s113
    %p124 = scmp.eq.s32.totalorder %s14, 0
    %p125 = por %p123, %p124
    %p126 = scmp.ne.s32.totalorder %s112, %s113
    %p127 = scmp.eq.s32.totalorder %s15, 1
    %p128 = por %p126, %p127
    %p130 = scmp.ne.s32.totalorder %s113, %s129
    %p131 = scmp.eq.s32.totalorder %s15, 0
    %p132 = por %p130, %p131
    %s133 = ssub.s32 %s16, %s42
    %s134 = ssub.s32 %s17, %s38
    %s135 = sor.u32 %s133, %s134
    %s136 = ssub.s32 %s18, %s34
    %s137 = sor.u32 %s135, %s136
    %p138 = scmp.eq.s32.totalorder %s137, 0
    %s140 = sadd.s32 %s139, 1
    %s141 = scalar_select %p138, %s139, %s140
    %p144 = pneg %p138
    %p145 = scmp.eq.s32.totalorder %s9, 1
    %p146 = por %p144, %p145
    %p147 = scmp.ne.s32.totalorder %s139, %s142
    %p148 = scmp.eq.s32.totalorder %s9, 0
    %p149 = por %p147, %p148
    %p150 = scmp.ne.s32.totalorder %s139, %s142
    %p151 = scmp.eq.s32.totalorder %s14, 1
    %p152 = por %p150, %p151
    %p153 = scmp.ne.s32.totalorder %s142, %s143
    %p154 = scmp.eq.s32.totalorder %s14, 0
    %p155 = por %p153, %p154
    %p156 = scmp.ne.s32.totalorder %s142, %s143
    %p157 = scmp.eq.s32.totalorder %s15, 1
    %p158 = por %p156, %p157
    %p160 = scmp.ne.s32.totalorder %s143, %s159
    %p161 = scmp.eq.s32.totalorder %s15, 0
    %p162 = por %p160, %p161
    %p163 = scmp.le.s32.totalorder 1, %s9
    %p164 = scmp.lt.s32.totalorder %s9, 3
    %p165 = pnand %p163, %p164
    %p166 = pneg %p165
    // Predicated region
    $region9: #{gpt_forward.18} parent=5 // pred_check
      _
    $region10: #{gpt_forward.18} parent=5 // pred_check_branch
      %168 = sbr.rel (%p165) target = $region12
    $region11: #{gpt_forward.18} parent=5 // pred_region
      %s169 = ssub.s32 %s9, 1
    $region12: #{gpt_forward.18} parent=5 // pred_fallthru
      _
    %p170 = scmp.lt.s32.totalorder %s9, 2
    // Predicated region
    $region13: #{gpt_forward.18} parent=5 // pred_check
      %p171 = pneg %p170
    $region14: #{gpt_forward.18} parent=5 // pred_check_branch
      %173 = sbr.rel (%p171) target = $region16
    $region15: #{gpt_forward.18} parent=5 // pred_region
      // Predicated region
      $region17: #{gpt_forward.18} parent=15 // pred_check
        %p174 = pneg %p59
      $region18: #{gpt_forward.18} parent=15 // pred_check_branch
        %176 = sbr.rel (%p174) target = $region20
      $region19: #{gpt_forward.18} parent=15 // pred_region
        %p177 = scmp.lt.s32.totalorder %s16, 1
        %s178 = scalar_select %p177, %s16, 1
        %p179 = scmp.lt.s32.totalorder %s17, 0
        %s180 = scalar_select %p179, %s17, 0
        %p181 = scmp.lt.s32.totalorder %s18, 0
        %s182 = scalar_select %p181, %s18, 0
        %s183 = sadd.s32 %s182, %s180
        %s184 = sadd.s32 %s183, %s178
        %s185 = smul.addr %s184, 4
        %s186 = scalar_lea.vmem %s0, %s185
      $region20: #{gpt_forward.18} parent=15 // pred_fallthru
        _
      // Predicated region
      $region21: #{gpt_forward.18} parent=15 // pred_check
        %p187 = pneg %p89
      $region22: #{gpt_forward.18} parent=15 // pred_check_branch
        %189 = sbr.rel (%p187) target = $region24
      $region23: #{gpt_forward.18} parent=15 // pred_region
        %p190 = scmp.lt.s32.totalorder %s16, 1
        %s191 = scalar_select %p190, %s16, 1
        %p192 = scmp.lt.s32.totalorder %s19, 0
        %s193 = scalar_select %p192, %s19, 0
        %p194 = scmp.lt.s32.totalorder %s18, 0
        %s195 = scalar_select %p194, %s18, 0
        %s196 = sadd.s32 %s195, %s193
        %s197 = sadd.s32 %s196, %s191
        %s198 = smul.addr %s197, 4
        %s199 = scalar_lea.vmem %s1, %s198
      $region24: #{gpt_forward.18} parent=15 // pred_fallthru
        _
      // Predicated region
      $region25: #{gpt_forward.18} parent=15 // pred_check
        %p200 = pneg %p119
      $region26: #{gpt_forward.18} parent=15 // pred_check_branch
        %202 = sbr.rel (%p200) target = $region28
      $region27: #{gpt_forward.18} parent=15 // pred_region
        %p203 = scmp.lt.s32.totalorder %s16, 1
        %s204 = scalar_select %p203, %s16, 1
        %p205 = scmp.lt.s32.totalorder %s19, 0
        %s206 = scalar_select %p205, %s19, 0
        %p207 = scmp.lt.s32.totalorder %s18, 0
        %s208 = scalar_select %p207, %s18, 0
        %s209 = sadd.s32 %s208, %s206
        %s210 = sadd.s32 %s209, %s204
        %s211 = smul.addr %s210, 4
        %s212 = scalar_lea.vmem %s2, %s211
      $region28: #{gpt_forward.18} parent=15 // pred_fallthru
        _
    $region16: #{gpt_forward.18} parent=5 // pred_fallthru
      _
    %p213 = scmp.le.s32.totalorder 1, %s9
    %p214 = scmp.lt.s32.totalorder %s9, 3
    %p215 = pnand %p213, %p214
    %p216 = pneg %p215
    // Predicated region
    $region29: #{gpt_forward.18} parent=5 // pred_check
      _
    $region30: #{gpt_forward.18} parent=5 // pred_check_branch
      %218 = sbr.rel (%p215) target = $region32
    $region31: #{gpt_forward.18} parent=5 // pred_region
      %s219 = ssub.s32 %s9, 1
      %p220 = scmp.lt.s32.totalorder %s20, 1
      %s221 = scalar_select %p220, %s20, 1
      %p222 = scmp.lt.s32.totalorder %s21, 0
      %s223 = scalar_select %p222, %s21, 0
      %p224 = scmp.lt.s32.totalorder %s22, 0
      %s225 = scalar_select %p224, %s22, 0
      %s226 = sadd.s32 %s225, %s223
      %s227 = sadd.s32 %s226, %s221
      %s228 = smul.addr %s227, 4
      %s229 = scalar_lea.vmem %s0, %s228
      %p230 = pneg %p65
      %p231 = pneg %p62
      %p232 = scmp.lt.s32.totalorder %s20, 1
      %s233 = scalar_select %p232, %s20, 1
      %p234 = scmp.lt.s32.totalorder %s23, 0
      %s235 = scalar_select %p234, %s23, 0
      %p236 = scmp.lt.s32.totalorder %s22, 0
      %s237 = scalar_select %p236, %s22, 0
      %s238 = sadd.s32 %s237, %s235
      %s239 = sadd.s32 %s238, %s233
      %s240 = smul.addr %s239, 4
      %s241 = scalar_lea.vmem %s1, %s240
      %p242 = pneg %p95
      %p243 = pneg %p92
      %p244 = scmp.lt.s32.totalorder %s20, 1
      %s245 = scalar_select %p244, %s20, 1
      %p246 = scmp.lt.s32.totalorder %s23, 0
      %s247 = scalar_select %p246, %s23, 0
      %p248 = scmp.lt.s32.totalorder %s22, 0
      %s249 = scalar_select %p248, %s22, 0
      %s250 = sadd.s32 %s249, %s247
      %s251 = sadd.s32 %s250, %s245
      %s252 = smul.addr %s251, 4
      %s253 = scalar_lea.vmem %s2, %s252
      %p254 = pneg %p125
      %p255 = pneg %p122
      %p256 = pneg %p155
      %p257 = pneg %p152
      %p258 = scmp.lt.s32.totalorder %s20, 1
      %s259 = scalar_select %p258, %s20, 1
      %p260 = scmp.lt.s32.totalorder %s21, 0
      %s261 = scalar_select %p260, %s21, 0
      %p262 = scmp.lt.s32.totalorder %s22, 0
      %s263 = scalar_select %p262, %s22, 0
      %s264 = sadd.s32 %s263, %s261
      %s265 = sadd.s32 %s264, %s259
      %s266 = smul.addr %s265, 4
      %s267 = scalar_lea.vmem %s3, %s266
      %p268 = scmp.lt.s32.totalorder %s20, 1
      %s269 = scalar_select %p268, %s20, 1
      %p270 = scmp.lt.s32.totalorder %s21, 0
      %s271 = scalar_select %p270, %s21, 0
      %p272 = scmp.lt.s32.totalorder %s22, 0
      %s273 = scalar_select %p272, %s22, 0
      %s274 = sadd.s32 %s273, %s271
      %s275 = sadd.s32 %s274, %s269
      %s276 = smul.addr %s275, 4
      %s277 = scalar_lea.vmem %s0, %s276
      %p278 = scmp.lt.s32.totalorder %s20, 1
      %s279 = scalar_select %p278, %s20, 1
      %p280 = scmp.lt.s32.totalorder %s23, 0
      %s281 = scalar_select %p280, %s23, 0
      %p282 = scmp.lt.s32.totalorder %s22, 0
      %s283 = scalar_select %p282, %s22, 0
      %s284 = sadd.s32 %s283, %s281
      %s285 = sadd.s32 %s284, %s279
      %s286 = smul.addr %s285, 4
      %s287 = scalar_lea.vmem %s1, %s286
      %p288 = scmp.lt.s32.totalorder %s20, 1
      %s289 = scalar_select %p288, %s20, 1
      %p290 = scmp.lt.s32.totalorder %s23, 0
      %s291 = scalar_select %p290, %s23, 0
      %p292 = scmp.lt.s32.totalorder %s22, 0
      %s293 = scalar_select %p292, %s22, 0
      %s294 = sadd.s32 %s293, %s291
      %s295 = sadd.s32 %s294, %s289
      %s296 = smul.addr %s295, 4
      %s297 = scalar_lea.vmem %s2, %s296
      %p298 = scmp.lt.s32.totalorder %s20, 1
      %s299 = scalar_select %p298, %s20, 1
      %p300 = scmp.lt.s32.totalorder %s21, 0
      %s301 = scalar_select %p300, %s21, 0
      %p302 = scmp.lt.s32.totalorder %s22, 0
      %s303 = scalar_select %p302, %s22, 0
      %s304 = sadd.s32 %s303, %s301
      %s305 = sadd.s32 %s304, %s299
      %s306 = smul.addr %s305, 4
      %s307 = scalar_lea.vmem %s3, %s306
      %p308 = scmp.eq.s32.totalorder %s23, 0
      // Predicated region
      $region33: #{gpt_forward.18} parent=31 // pred_check
        %p309 = pneg %p308
      $region34: #{gpt_forward.18} parent=31 // pred_check_branch
        %311 = sbr.rel (%p309) target = $region36
      $region35: #{gpt_forward.18} parent=31 // pred_region
        %vm312 = vcmask 261120
        %313 = vst.msk [vmem:[#allocation2] sm:$0xff] %vm312, -1e+30
        %314 = vst.msk [vmem:[#allocation3] sm:$0xff] %vm312, 0.0
        %315 = vst.msk [vmem:[#allocation4] sm:$0xff] %vm312, 0.0
      $region36: #{gpt_forward.18} parent=31 // pred_fallthru
        _
      %s316 = smul.u32 %s21, 8
      %s317 = smul.u32 %s23, 8
      %s318 = sadd.s32 %s316, 7
      %p319 = scmp.le.s32.totalorder %s317, %s318
      // Predicated region
      $region37: #{gpt_forward.18} parent=31 // pred_check
        %p320 = pneg %p319
      $region38: #{gpt_forward.18} parent=31 // pred_check_branch
        %322 = sbr.rel (%p320) target = $region40
      $region39: #{gpt_forward.18} parent=31 // pred_region
        %v323 = vld [vmem:[%s277] sm:$0xf]
        %v324 = vunpack.c.l.bf16 %v323
        %v325 = vld [vmem:[%s287] sm:$0xf]
        %v326 = vunpack.c.l.bf16 %v325
        %vm327 = vcmask 261120
        %328 = vst.msk [vmem:[#allocation5] sm:$0xff] %vm327, %v326
        %v329 = vld [vmem:[%s297] sm:$0xf]
        %v330 = vunpack.c.l.bf16 %v329
        %331 = vst.msk [vmem:[#allocation6] sm:$0xff] %vm327, %v330
        %v332 = vlaneseq
        %v333 = vshrl.u32 %v332, 7
        %v334 = vstv %s316
        %v335 = vadd.s32 %v334, %v333
        loop: start=0, step=1, limit=8
        $region41: #{gpt_forward.18} parent=39 // loop_pre_header
          _
        $region42: #{gpt_forward.18} parent=39 // loop_header
          %s337 = sphi 0, %s341
          %p338 = scmp.ge.s32.totalorder %s337, 8
          %v342 = vphi -1e+30, %v354
        $region43: #{gpt_forward.18} parent=39 // loop_header_branch
          %340 = sbr.rel (%p338) target = $region47
        $region44: #{gpt_forward.18} parent=39 // loop_body
          %s343 = scalar_lea.vmem [#allocation5], %s337
          %v344 = vld [vmem:[%s343] sm:$0x1]
          %v345 = vlaneseq
          %v346 = vshrl.u32 %v345, 7
          %v347 = vsub.s32 0, %v346
          %v348 = vrot.slane %v344, %v347
          %v349 = vmul.f32 %v324, %v348
          %s350 = sadd.s32 %s317, %s337
          %v351 = vstv %s350
          %vm352 = vcmp.ge.s32.totalorder %v335, %v351
          %v353 = vsel %vm352, %v349, -1e+30
          %v354 = vmax.f32 %v342, %v353
        $region45: #{gpt_forward.18} parent=39 // loop_footer
          %s341 = sadd.s32 1, %s337
        $region46: #{gpt_forward.18} parent=39 // loop_footer_branch
          %336 = sbr.rel target = $region42
        $region47: #{gpt_forward.18} parent=39 // loop_exit
          _
        %v355 = vld [vmem:[#allocation2] sm:$0xff]
        %v356 = vmax.f32 %v355, %v342
        %v357 = vsub.f32 %v355, %v356
        %v358 = vmul.f32 %v357, 1.442695
        %v359 = vpow.pop %v358
        loop: start=0, step=1, limit=8
        $region48: #{gpt_forward.18} parent=39 // loop_pre_header
          _
        $region49: #{gpt_forward.18} parent=39 // loop_header
          %s361 = sphi 0, %s365
          %p362 = scmp.ge.s32.totalorder %s361, 8
          %v366 = vphi 0.0, %v384
          %v367 = vphi 0.0, %v390
        $region50: #{gpt_forward.18} parent=39 // loop_header_branch
          %364 = sbr.rel (%p362) target = $region54
        $region51: #{gpt_forward.18} parent=39 // loop_body
          %s368 = scalar_lea.vmem [#allocation5], %s361
          %v369 = vld [vmem:[%s368] sm:$0x1]
          %v370 = vlaneseq
          %v371 = vshrl.u32 %v370, 7
          %v372 = vsub.s32 0, %v371
          %v373 = vrot.slane %v369, %v372
          %v374 = vmul.f32 %v324, %v373
          %s375 = sadd.s32 %s317, %s361
          %v376 = vstv %s375
          %vm377 = vcmp.ge.s32.totalorder %v335, %v376
          %v378 = vsel %vm377, %v374, -1e+30
          %v379 = vsub.f32 %v378, %v356
          %v380 = vmul.f32 %v379, 1.442695
          %v381 = vpow.pop %v380
          %s382 = scalar_lea.vmem [#allocation6], %s361
          %v383 = vld [vmem:[%s382] sm:$0x1]
          %v384 = vadd.f32 %v366, %v381
          %v385 = vlaneseq
          %v386 = vshrl.u32 %v385, 7
          %v387 = vsub.s32 0, %v386
          %v388 = vrot.slane %v383, %v387
          %v389 = vmul.f32 %v381, %v388
          %v390 = vadd.f32 %v367, %v389
        $region52: #{gpt_forward.18} parent=39 // loop_footer
          %s365 = sadd.s32 1, %s361
        $region53: #{gpt_forward.18} parent=39 // loop_footer_branch
          %360 = sbr.rel target = $region49
        $region54: #{gpt_forward.18} parent=39 // loop_exit
          _
        %391 = vst.msk [vmem:[#allocation2] sm:$0xff] %vm327, %v356
        %v392 = vld [vmem:[#allocation3] sm:$0xff]
        %v393 = vmul.f32 %v359, %v392
        %v394 = vadd.f32 %v393, %v366
        %395 = vst.msk [vmem:[#allocation3] sm:$0xff] %vm327, %v394
        %v396 = vld [vmem:[#allocation4] sm:$0xff]
        %v397 = vmul.f32 %v359, %v396
        %v398 = vadd.f32 %v397, %v367
        %399 = vst.msk [vmem:[#allocation4] sm:$0xff] %vm327, %v398
      $region40: #{gpt_forward.18} parent=31 // pred_fallthru
        _
      // Predicated region
      $region55: #{gpt_forward.18} parent=31 // pred_check
        %p400 = pneg %p308
      $region56: #{gpt_forward.18} parent=31 // pred_check_branch
        %402 = sbr.rel (%p400) target = $region58
      $region57: #{gpt_forward.18} parent=31 // pred_region
        %v403 = vld [vmem:[#allocation4] sm:$0xff]
        %v404 = vld [vmem:[#allocation3] sm:$0xff]
        %v405 = vrcp.pop %v404
        %v406 = vmul.f32 %v403, %v405
        %v407 = vpack.c.bf16 %v406, %v406
        %vm408 = vcmask 257024
        %409 = vst.msk [vmem:[%s307] sm:$0xf] %vm408, %v407
      $region58: #{gpt_forward.18} parent=31 // pred_fallthru
        _
      %p410 = scmp.lt.s32.totalorder %s20, 1
      %s411 = scalar_select %p410, %s20, 1
      %p412 = scmp.lt.s32.totalorder %s21, 0
      %s413 = scalar_select %p412, %s21, 0
      %p414 = scmp.lt.s32.totalorder %s22, 0
      %s415 = scalar_select %p414, %s22, 0
      %s416 = sadd.s32 %s415, %s413
      %s417 = sadd.s32 %s416, %s411
      %s418 = smul.addr %s417, 4
      %s419 = scalar_lea.vmem %s3, %s418
      // Predicated region
      $region59: #{gpt_forward.18} parent=31 // pred_check
        %p420 = pneg %p152
      $region60: #{gpt_forward.18} parent=31 // pred_check_branch
        %422 = sbr.rel (%p420) target = $region62
      $region61: #{gpt_forward.18} parent=31 // pred_region
        _
      $region62: #{gpt_forward.18} parent=31 // pred_fallthru
        _
    $region32: #{gpt_forward.18} parent=5 // pred_fallthru
      _
    %p423 = scmp.le.s32.totalorder 2, %s9
    // Predicated region
    $region63: #{gpt_forward.18} parent=5 // pred_check
      %p424 = pneg %p423
    $region64: #{gpt_forward.18} parent=5 // pred_check_branch
      %426 = sbr.rel (%p424) target = $region66
    $region65: #{gpt_forward.18} parent=5 // pred_region
      %s427 = ssub.s32 %s9, 2
      // Predicated region
      $region67: #{gpt_forward.18} parent=65 // pred_check
        %p428 = pneg %p158
      $region68: #{gpt_forward.18} parent=65 // pred_check_branch
        %430 = sbr.rel (%p428) target = $region70
      $region69: #{gpt_forward.18} parent=65 // pred_region
        %p431 = scmp.lt.s32.totalorder %s24, 1
        %s432 = scalar_select %p431, %s24, 1
        %p433 = scmp.lt.s32.totalorder %s25, 0
        %s434 = scalar_select %p433, %s25, 0
        %p435 = scmp.lt.s32.totalorder %s26, 0
        %s436 = scalar_select %p435, %s26, 0
        %s437 = sadd.s32 %s436, %s434
        %s438 = sadd.s32 %s437, %s432
        %s439 = smul.addr %s438, 4
        %s440 = scalar_lea.vmem %s3, %s439
      $region70: #{gpt_forward.18} parent=65 // pred_fallthru
        _
    $region66: #{gpt_forward.18} parent=5 // pred_fallthru
      _
  $region6: #{gpt_forward.18} parent=0 // loop_footer
    %s13 = sadd.s32 1, %s9
  $region7: #{gpt_forward.18} parent=0 // loop_footer_branch
    %8 = sbr.rel target = $region3
  $region8: #{gpt_forward.18} parent=0 // loop_exit
    _

// kernel: gpt_forward.31
$region0: #{gpt_forward.31}
  #allocation0 [shape = 'u32[]', space=smem, size = 0x4, offset = 0x4, fixed_abs, tag = 'smem constant byte address 0x4 - core index']
  #allocation1 [shape = 'u32[144,128]{1,0:T(1,128)}', space=vmem, size = 0x12000, scoped, tag = 'internal scratch']
  #allocation2 [shape = 'f32[16,64]{1,0:T(8,128)}', space=vmem, size = 0x2000, scoped, tag = 'scratch operand']
  %s0 = inlined_call_operand.vmem [shape: bf16[16,32], index: 0, kind: input, shape index: {}]
  %s1 = inlined_call_operand.vmem [shape: bf16[32,64], index: 1, kind: input, shape index: {}]
  %s2 = inlined_call_operand.hbm [shape: f32[16,64], index: 2, kind: output, shape index: {}]
  %s3 = sld [smem:[#allocation0]]
  $region26: #{gpt_forward.31} parent=0
    _
  %s5 = ssub.s32 1, %s3
  %s6 = scalar_select 0, %s5, %s3
  $region1: #{gpt_forward.31} parent=0
    #allocation3 [shape = 'u8[8192]{0}', space=vmem, size = 0x2000, scoped, tag = 'output window, operand 0, single buffered']
    #allocation4 [shape = 's32[1]{0}', space=sflag, size = 0x4, scoped, tag = 'scoped memory for gpt_forward.31']
    %7 = vsyncpa [#allocation4], 0
    // Predicated region
    $region2: #{gpt_forward.31} parent=1 // pred_check
      _
    $region3: #{gpt_forward.31} parent=1 // pred_check_branch
      %9 = sbr.rel (0) target = $region5
    $region4: #{gpt_forward.31} parent=1 // pred_region
      _
    $region5: #{gpt_forward.31} parent=1 // pred_fallthru
      _
    // Predicated region
    $region6: #{gpt_forward.31} parent=1 // pred_check
      _
    $region7: #{gpt_forward.31} parent=1 // pred_check_branch
      %11 = sbr.rel (0) target = $region9
    $region8: #{gpt_forward.31} parent=1 // pred_region
      _
    $region9: #{gpt_forward.31} parent=1 // pred_fallthru
      _
    %p13 = scmp.eq.s32.totalorder 0, 0
    // Predicated region
    $region10: #{gpt_forward.31} parent=1 // pred_check
      %p14 = pneg %p13
    $region11: #{gpt_forward.31} parent=1 // pred_check_branch
      %16 = sbr.rel (%p14) target = $region13
    $region12: #{gpt_forward.31} parent=1 // pred_region
      %vm17 = vcmask 523264
      %18 = vst.msk [vmem:[#allocation2] sm:$0xff] %vm17, 0.0
      %19 = vst.msk [vmem:[#allocation2 + $0x8] sm:$0xff] %vm17, 0.0
    $region13: #{gpt_forward.31} parent=1 // pred_fallthru
      _
    %v20 = vld [vmem:[#allocation2] sm:$0xff]
    %v21 = vld [vmem:[#allocation2 + $0x8] sm:$0xff]
    %v22 = vld [vmem:[%s0] sm:$0xf]
    %v23 = vld [vmem:[%s0 + $0x4] sm:$0xf]
    %v24 = vld [vmem:[%s1] sm:$0xf]
    %v25 = vld [vmem:[%s1 + $0x4] sm:$0xf]
    %v26 = vld [vmem:[%s1 + $0x8] sm:$0xf]
    %v27 = vld [vmem:[%s1 + $0xc] sm:$0xf]
    %v30 = vunpack.c.l.b16 %v22
    %v31 = vunpack.c.l.b16 %v23
    %v32 = vpack.c.b16 %v31, %v30
    %v37 = vunpack.c.l.b16 %v24
    %v38 = vunpack.c.l.b16 %v25
    %v39 = vunpack.c.l.b16 %v26
    %v40 = vunpack.c.l.b16 %v27
    %v41 = vpack.c.b16 %v38, %v37
    %v42 = vpack.c.b16 %v40, %v39
    %vm45 = vcmask 261120
    %v47 = vsel %vm45, %v32, 0
    %49 = vmatprep.subr.bf16.mxu0 0
    %50 = vmatpush1.bf16.msra.mxu0 %v41
    %51 = vmatprep.subr.bf16.mxu0 0
    %52 = vmatpush1.bf16.msra.mxu0 %v42
    %53 = vmatprep.subr.bf16.mxu0 0
    %54 = vmatpush1.bf16.msra.mxu0 0
    %55 = vmatprep.subr.bf16.mxu0 0
    %56 = vmatpush1.bf16.msra.mxu0 0
    %57 = vmatprep.subr.bf16.mxu0 0
    %58 = vmatpush1.bf16.msra.mxu0 0
    %59 = vmatprep.subr.bf16.mxu0 0
    %60 = vmatpush1.bf16.msra.mxu0 0
    %61 = vmatprep.subr.bf16.mxu0 0
    %62 = vmatpush1.bf16.msra.mxu0 0
    %63 = vmatprep.subr.bf16.mxu0 0
    %64 = vmatpush1.bf16.msra.mxu0 0
    %65 = vmatprep.subr.bf16.mxu0 0
    %66 = vmatpush1.bf16.msra.mxu0 0
    %67 = vmatprep.subr.bf16.mxu0 0
    %68 = vmatpush1.bf16.msra.mxu0 0
    %69 = vmatprep.subr.bf16.mxu0 0
    %70 = vmatpush1.bf16.msra.mxu0 0
    %71 = vmatprep.subr.bf16.mxu0 0
    %72 = vmatpush1.bf16.msra.mxu0 0
    %73 = vmatprep.subr.bf16.mxu0 0
    %74 = vmatpush1.bf16.msra.mxu0 0
    %75 = vmatprep.subr.bf16.mxu0 0
    %76 = vmatpush1.bf16.msra.mxu0 0
    %77 = vmatprep.subr.bf16.mxu0 0
    %78 = vmatpush1.bf16.msra.mxu0 0
    %79 = vmatprep.subr.bf16.mxu0 0
    %80 = vmatpush1.bf16.msra.mxu0 0
    %81 = vmatprep.mubr.bf16.mxu0 0
    %82 = vmatmul.mubr.bf16.gmra.mrb[0].mxu0 %v47
    %v83 = vpop.f32.mrb[0].mxu0
    %v84 = vadd.f32 0.0, %v83
    %v85 = vpop.f32.mrb[0].mxu0
    %v86 = vpop.f32.mrb[0].mxu0
    %v87 = vadd.f32 0.0, %v86
    %v88 = vpop.f32.mrb[0].mxu0
    %89 = vdwg.mxu0
    %v90 = vadd.f32 %v20, %v84
    %v91 = vadd.f32 %v21, %v87
    %vm92 = vcmask 523264
    %93 = vst.msk [vmem:[#allocation2] sm:$0xff] %vm92, %v90
    %94 = vst.msk [vmem:[#allocation2 + $0x8] sm:$0xff] %vm92, %v91
    // Predicated region
    $region14: #{gpt_forward.31} parent=1 // pred_check
      %p95 = pneg %p13
    $region15: #{gpt_forward.31} parent=1 // pred_check_branch
      %97 = sbr.rel (%p95) target = $region17
    $region16: #{gpt_forward.31} parent=1 // pred_region
      %v98 = vld [vmem:[#allocation2] sm:$0xff]
      %v99 = vld [vmem:[#allocation2 + $0x8] sm:$0xff]
      %100 = vst.msk [vmem:[#allocation3] sm:$0xff] %vm92, %v98
      %101 = vst.msk [vmem:[#allocation3 + $0x8] sm:$0xff] %vm92, %v99
    $region17: #{gpt_forward.31} parent=1 // pred_fallthru
      _
    // Predicated region
    $region18: #{gpt_forward.31} parent=1 // pred_check
      _
    $region19: #{gpt_forward.31} parent=1 // pred_check_branch
      %103 = sbr.rel (0) target = $region21
    $region20: #{gpt_forward.31} parent=1 // pred_region
      %s105 = ssub.s32 256, 256
      %106 = vsyncadd [#allocation4], %s105
      %s107 = sshll.u32 [#allocation3], 4
      %s108 = int_to_ptr.vmem [resolvable:$true] %s107
      %113 = dma.vmem_to_hbm [thread:$0]  %s108, 256, %s2, [#allocation4], 128, 128, 8
    $region21: #{gpt_forward.31} parent=1 // pred_fallthru
      _
    // Predicated region
    $region22: #{gpt_forward.31} parent=1 // pred_check
      _
    $region23: #{gpt_forward.31} parent=1 // pred_check_branch
      %115 = sbr.rel (0) target = $region25
    $region24: #{gpt_forward.31} parent=1 // pred_region
      %116 = dma.done [#allocation4], 256
    $region25: #{gpt_forward.31} parent=1 // pred_fallthru
      _
    %117 = vsyncpa [#allocation4], 1

// kernel: gpt_forward.22
$region0: #{gpt_forward.22}
  #allocation0 [shape = 'u32[]', space=smem, size = 0x4, offset = 0x4, fixed_abs, tag = 'smem constant byte address 0x4 - core index']
  #allocation1 [shape = 'u32[144,128]{1,0:T(1,128)}', space=vmem, size = 0x12000, scoped, tag = 'internal scratch']
  #allocation2 [shape = 'f32[16,32]{1,0:T(8,128)}', space=vmem, size = 0x2000, scoped, tag = 'scratch operand']
  %s0 = inlined_call_operand.vmem [shape: bf16[16,128], index: 0, kind: input, shape index: {}]
  %s1 = inlined_call_operand.vmem [shape: bf16[128,32], index: 1, kind: input, shape index: {}]
  %s2 = inlined_call_operand.vmem [shape: f32[1,32], index: 2, kind: input, shape index: {}]
  %s3 = inlined_call_operand.vmem [shape: bf16[16,32], index: 3, kind: input, shape index: {}]
  %s4 = inlined_call_operand.vmem [shape: bf16[16,32], index: 4, kind: output, shape index: {}]
  %s5 = sld [smem:[#allocation0]]
  $region34: #{gpt_forward.22} parent=0
    _
  %s7 = ssub.s32 1, %s5
  %s8 = scalar_select 0, %s7, %s5
  // Predicated region
  $region2: #{gpt_forward.22} parent=0 // pred_check
    _
  $region3: #{gpt_forward.22} parent=0 // pred_check_branch
    %10 = sbr.rel (0) target = $region5
  $region4: #{gpt_forward.22} parent=0 // pred_region
    _
  $region5: #{gpt_forward.22} parent=0 // pred_fallthru
    _
  // Predicated region
  $region6: #{gpt_forward.22} parent=0 // pred_check
    _
  $region7: #{gpt_forward.22} parent=0 // pred_check_branch
    %12 = sbr.rel (0) target = $region9
  $region8: #{gpt_forward.22} parent=0 // pred_region
    _
  $region9: #{gpt_forward.22} parent=0 // pred_fallthru
    _
  // Predicated region
  $region10: #{gpt_forward.22} parent=0 // pred_check
    _
  $region11: #{gpt_forward.22} parent=0 // pred_check_branch
    %14 = sbr.rel (0) target = $region13
  $region12: #{gpt_forward.22} parent=0 // pred_region
    _
  $region13: #{gpt_forward.22} parent=0 // pred_fallthru
    _
  // Predicated region
  $region14: #{gpt_forward.22} parent=0 // pred_check
    _
  $region15: #{gpt_forward.22} parent=0 // pred_check_branch
    %16 = sbr.rel (0) target = $region17
  $region16: #{gpt_forward.22} parent=0 // pred_region
    _
  $region17: #{gpt_forward.22} parent=0 // pred_fallthru
    _
  %p18 = scmp.eq.s32.totalorder 0, 0
  // Predicated region
  $region18: #{gpt_forward.22} parent=0 // pred_check
    %p19 = pneg %p18
  $region19: #{gpt_forward.22} parent=0 // pred_check_branch
    %21 = sbr.rel (%p19) target = $region21
  $region20: #{gpt_forward.22} parent=0 // pred_region
    %vm22 = vcmask 261120
    %23 = vst.msk [vmem:[#allocation2] sm:$0xff] %vm22, 0.0
    %24 = vst.msk [vmem:[#allocation2 + $0x8] sm:$0xff] %vm22, 0.0
  $region21: #{gpt_forward.22} parent=0 // pred_fallthru
    _
  %v25 = vld [vmem:[#allocation2] sm:$0xff]
  %v26 = vld [vmem:[#allocation2 + $0x8] sm:$0xff]
  %v27 = vld [vmem:[%s0] sm:$0xf]
  %v28 = vld [vmem:[%s0 + $0x4] sm:$0xf]
  %v29 = vld [vmem:[%s1] sm:$0xf]
  %v30 = vld [vmem:[%s1 + $0x4] sm:$0xf]
  %v31 = vld [vmem:[%s1 + $0x8] sm:$0xf]
  %v32 = vld [vmem:[%s1 + $0xc] sm:$0xf]
  %v33 = vld [vmem:[%s1 + $0x10] sm:$0xf]
  %v34 = vld [vmem:[%s1 + $0x14] sm:$0xf]
  %v35 = vld [vmem:[%s1 + $0x18] sm:$0xf]
  %v36 = vld [vmem:[%s1 + $0x1c] sm:$0xf]
  %v37 = vld [vmem:[%s1 + $0x20] sm:$0xf]
  %v38 = vld [vmem:[%s1 + $0x24] sm:$0xf]
  %v39 = vld [vmem:[%s1 + $0x28] sm:$0xf]
  %v40 = vld [vmem:[%s1 + $0x2c] sm:$0xf]
  %v41 = vld [vmem:[%s1 + $0x30] sm:$0xf]
  %v42 = vld [vmem:[%s1 + $0x34] sm:$0xf]
  %v43 = vld [vmem:[%s1 + $0x38] sm:$0xf]
  %v44 = vld [vmem:[%s1 + $0x3c] sm:$0xf]
  %v47 = vunpack.c.l.b16 %v27
  %v48 = vunpack.c.l.b16 %v28
  %v49 = vpack.c.b16 %v48, %v47
  %v67 = vunpack.c.l.b16 %v29
  %v68 = vunpack.c.l.b16 %v30
  %v69 = vunpack.c.l.b16 %v31
  %v70 = vunpack.c.l.b16 %v32
  %v71 = vunpack.c.l.b16 %v33
  %v72 = vunpack.c.l.b16 %v34
  %v73 = vunpack.c.l.b16 %v35
  %v74 = vunpack.c.l.b16 %v36
  %v75 = vunpack.c.l.b16 %v37
  %v76 = vunpack.c.l.b16 %v38
  %v77 = vunpack.c.l.b16 %v39
  %v78 = vunpack.c.l.b16 %v40
  %v79 = vunpack.c.l.b16 %v41
  %v80 = vunpack.c.l.b16 %v42
  %v81 = vunpack.c.l.b16 %v43
  %v82 = vunpack.c.l.b16 %v44
  %v83 = vpack.c.b16 %v68, %v67
  %v84 = vpack.c.b16 %v70, %v69
  %v85 = vpack.c.b16 %v72, %v71
  %v86 = vpack.c.b16 %v74, %v73
  %v87 = vpack.c.b16 %v76, %v75
  %v88 = vpack.c.b16 %v78, %v77
  %v89 = vpack.c.b16 %v80, %v79
  %v90 = vpack.c.b16 %v82, %v81
  %99 = vmatprep.subr.bf16.mxu0 0
  %100 = vmatpush1.bf16.msra.mxu0 %v83
  %101 = vmatprep.subr.bf16.mxu0 0
  %102 = vmatpush1.bf16.msra.mxu0 %v84
  %103 = vmatprep.subr.bf16.mxu0 0
  %104 = vmatpush1.bf16.msra.mxu0 %v85
  %105 = vmatprep.subr.bf16.mxu0 0
  %106 = vmatpush1.bf16.msra.mxu0 %v86
  %107 = vmatprep.subr.bf16.mxu0 0
  %108 = vmatpush1.bf16.msra.mxu0 %v87
  %109 = vmatprep.subr.bf16.mxu0 0
  %110 = vmatpush1.bf16.msra.mxu0 %v88
  %111 = vmatprep.subr.bf16.mxu0 0
  %112 = vmatpush1.bf16.msra.mxu0 %v89
  %113 = vmatprep.subr.bf16.mxu0 0
  %114 = vmatpush1.bf16.msra.mxu0 %v90
  %115 = vmatprep.subr.bf16.mxu0 0
  %116 = vmatpush1.bf16.msra.mxu0 0
  %117 = vmatprep.subr.bf16.mxu0 0
  %118 = vmatpush1.bf16.msra.mxu0 0
  %119 = vmatprep.subr.bf16.mxu0 0
  %120 = vmatpush1.bf16.msra.mxu0 0
  %121 = vmatprep.subr.bf16.mxu0 0
  %122 = vmatpush1.bf16.msra.mxu0 0
  %123 = vmatprep.subr.bf16.mxu0 0
  %124 = vmatpush1.bf16.msra.mxu0 0
  %125 = vmatprep.subr.bf16.mxu0 0
  %126 = vmatpush1.bf16.msra.mxu0 0
  %127 = vmatprep.subr.bf16.mxu0 0
  %128 = vmatpush1.bf16.msra.mxu0 0
  %129 = vmatprep.subr.bf16.mxu0 0
  %130 = vmatpush1.bf16.msra.mxu0 0
  %131 = vmatprep.mubr.bf16.mxu0 0
  %132 = vmatmul.mubr.bf16.gmra.mrb[0].mxu0 %v49
  %v133 = vpop.f32.mrb[0].mxu0
  %v134 = vadd.f32 0.0, %v133
  %v135 = vpop.f32.mrb[0].mxu0
  %v136 = vpop.f32.mrb[0].mxu0
  %v137 = vadd.f32 0.0, %v136
  %v138 = vpop.f32.mrb[0].mxu0
  %139 = vdwg.mxu0
  %v140 = vadd.f32 %v25, %v134
  %v141 = vadd.f32 %v26, %v137
  %vm142 = vcmask 261120
  %143 = vst.msk [vmem:[#allocation2] sm:$0xff] %vm142, %v140
  %144 = vst.msk [vmem:[#allocation2 + $0x8] sm:$0xff] %vm142, %v141
  // Predicated region
  $region22: #{gpt_forward.22} parent=0 // pred_check
    %p145 = pneg %p18
  $region23: #{gpt_forward.22} parent=0 // pred_check_branch
    %147 = sbr.rel (%p145) target = $region25
  $region24: #{gpt_forward.22} parent=0 // pred_region
    %v148 = vld [vmem:[#allocation2] sm:$0xff]
    %v149 = vld [vmem:[#allocation2 + $0x8] sm:$0xff]
    %v150 = vld [vmem:[%s2] sm:$0x1]
    %v152 = vlaneseq
    %v153 = vshrl.u32 %v152, 7
    %v154 = vsub.s32 0, %v153
    %v155 = vrot.slane %v150, %v154
    %v157 = vadd.f32 %v148, %v155
    %v158 = vadd.f32 %v149, %v155
    %v159 = vld [vmem:[%s3] sm:$0xf]
    %v160 = vld [vmem:[%s3 + $0x4] sm:$0xf]
    %v161 = vunpack.c.l.bf16 %v159
    %v162 = vunpack.c.l.bf16 %v160
    %v163 = vadd.f32 %v157, %v161
    %v164 = vadd.f32 %v158, %v162
    %v165 = vpack.c.bf16 %v164, %v163
    %v167 = vunpack.c.l.b16 %v165
    %v168 = vunpack.c.h.b16 %v165
    %v169 = vpack.c.b16 %v167, %v167
    %v170 = vpack.c.b16 %v168, %v168
    %vm173 = vcmask 257024
    %174 = vst.msk [vmem:[%s4] sm:$0xf] %vm173, %v169
    %175 = vst.msk [vmem:[%s4 + $0x4] sm:$0xf] %vm173, %v170
  $region25: #{gpt_forward.22} parent=0 // pred_fallthru
    _
  // Predicated region
  $region26: #{gpt_forward.22} parent=0 // pred_check
    _
  $region27: #{gpt_forward.22} parent=0 // pred_check_branch
    %177 = sbr.rel (0) target = $region29
  $region28: #{gpt_forward.22} parent=0 // pred_region
    _
  $region29: #{gpt_forward.22} parent=0 // pred_fallthru
    _
  // Predicated region
  $region30: #{gpt_forward.22} parent=0 // pred_check
    _
  $region31: #{gpt_forward.22} parent=0 // pred_check_branch
    %179 = sbr.rel (0) target = $region33
  $region32: #{gpt_forward.22} parent=0 // pred_region
    _
  $region33: #{gpt_forward.22} parent=0 // pred_fallthru
    _

// kernel: gpt_forward.21
$region0: #{gpt_forward.21}
  #allocation0 [shape = 'u32[]', space=smem, size = 0x4, offset = 0x4, fixed_abs, tag = 'smem constant byte address 0x4 - core index']
  #allocation1 [shape = 'u32[144,128]{1,0:T(1,128)}', space=vmem, size = 0x12000, scoped, tag = 'internal scratch']
  #allocation2 [shape = 'f32[16,128]{1,0:T(8,128)}', space=vmem, size = 0x2000, scoped, tag = 'scratch operand']
  %s0 = inlined_call_operand.vmem [shape: bf16[16,32], index: 0, kind: input, shape index: {}]
  %s1 = inlined_call_operand.vmem [shape: bf16[32,128], index: 1, kind: input, shape index: {}]
  %s2 = inlined_call_operand.vmem [shape: f32[1,128], index: 2, kind: input, shape index: {}]
  %s3 = inlined_call_operand.vmem [shape: bf16[16,128], index: 3, kind: output, shape index: {}]
  %s4 = sld [smem:[#allocation0]]
  $region30: #{gpt_forward.21} parent=0
    _
  %s6 = ssub.s32 1, %s4
  %s7 = scalar_select 0, %s6, %s4
  // Predicated region
  $region2: #{gpt_forward.21} parent=0 // pred_check
    _
  $region3: #{gpt_forward.21} parent=0 // pred_check_branch
    %9 = sbr.rel (0) target = $region5
  $region4: #{gpt_forward.21} parent=0 // pred_region
    _
  $region5: #{gpt_forward.21} parent=0 // pred_fallthru
    _
  // Predicated region
  $region6: #{gpt_forward.21} parent=0 // pred_check
    _
  $region7: #{gpt_forward.21} parent=0 // pred_check_branch
    %11 = sbr.rel (0) target = $region9
  $region8: #{gpt_forward.21} parent=0 // pred_region
    _
  $region9: #{gpt_forward.21} parent=0 // pred_fallthru
    _
  // Predicated region
  $region10: #{gpt_forward.21} parent=0 // pred_check
    _
  $region11: #{gpt_forward.21} parent=0 // pred_check_branch
    %13 = sbr.rel (0) target = $region13
  $region12: #{gpt_forward.21} parent=0 // pred_region
    _
  $region13: #{gpt_forward.21} parent=0 // pred_fallthru
    _
  %p15 = scmp.eq.s32.totalorder 0, 0
  // Predicated region
  $region14: #{gpt_forward.21} parent=0 // pred_check
    %p16 = pneg %p15
  $region15: #{gpt_forward.21} parent=0 // pred_check_branch
    %18 = sbr.rel (%p16) target = $region17
  $region16: #{gpt_forward.21} parent=0 // pred_region
    %19 = vst [vmem:[#allocation2] sm:$0xff] 0.0
    %20 = vst [vmem:[#allocation2 + $0x8] sm:$0xff] 0.0
  $region17: #{gpt_forward.21} parent=0 // pred_fallthru
    _
  %v21 = vld [vmem:[#allocation2] sm:$0xff]
  %v22 = vld [vmem:[#allocation2 + $0x8] sm:$0xff]
  %v23 = vld [vmem:[%s0] sm:$0xf]
  %v24 = vld [vmem:[%s0 + $0x4] sm:$0xf]
  %v25 = vld [vmem:[%s1] sm:$0xf]
  %v26 = vld [vmem:[%s1 + $0x4] sm:$0xf]
  %v27 = vld [vmem:[%s1 + $0x8] sm:$0xf]
  %v28 = vld [vmem:[%s1 + $0xc] sm:$0xf]
  %v31 = vunpack.c.l.b16 %v23
  %v32 = vunpack.c.l.b16 %v24
  %v33 = vpack.c.b16 %v32, %v31
  %v38 = vunpack.c.l.b16 %v25
  %v39 = vunpack.c.l.b16 %v26
  %v40 = vunpack.c.l.b16 %v27
  %v41 = vunpack.c.l.b16 %v28
  %v42 = vpack.c.b16 %v39, %v38
  %v43 = vpack.c.b16 %v41, %v40
  %vm46 = vcmask 261120
  %v48 = vsel %vm46, %v33, 0
  %50 = vmatprep.subr.bf16.mxu0 0
  %51 = vmatpush1.bf16.msra.mxu0 %v42
  %52 = vmatprep.subr.bf16.mxu0 0
  %53 = vmatpush1.bf16.msra.mxu0 %v43
  %54 = vmatprep.subr.bf16.mxu0 0
  %55 = vmatpush1.bf16.msra.mxu0 0
  %56 = vmatprep.subr.bf16.mxu0 0
  %57 = vmatpush1.bf16.msra.mxu0 0
  %58 = vmatprep.subr.bf16.mxu0 0
  %59 = vmatpush1.bf16.msra.mxu0 0
  %60 = vmatprep.subr.bf16.mxu0 0
  %61 = vmatpush1.bf16.msra.mxu0 0
  %62 = vmatprep.subr.bf16.mxu0 0
  %63 = vmatpush1.bf16.msra.mxu0 0
  %64 = vmatprep.subr.bf16.mxu0 0
  %65 = vmatpush1.bf16.msra.mxu0 0
  %66 = vmatprep.subr.bf16.mxu0 0
  %67 = vmatpush1.bf16.msra.mxu0 0
  %68 = vmatprep.subr.bf16.mxu0 0
  %69 = vmatpush1.bf16.msra.mxu0 0
  %70 = vmatprep.subr.bf16.mxu0 0
  %71 = vmatpush1.bf16.msra.mxu0 0
  %72 = vmatprep.subr.bf16.mxu0 0
  %73 = vmatpush1.bf16.msra.mxu0 0
  %74 = vmatprep.subr.bf16.mxu0 0
  %75 = vmatpush1.bf16.msra.mxu0 0
  %76 = vmatprep.subr.bf16.mxu0 0
  %77 = vmatpush1.bf16.msra.mxu0 0
  %78 = vmatprep.subr.bf16.mxu0 0
  %79 = vmatpush1.bf16.msra.mxu0 0
  %80 = vmatprep.subr.bf16.mxu0 0
  %81 = vmatpush1.bf16.msra.mxu0 0
  %82 = vmatprep.mubr.bf16.mxu0 0
  %83 = vmatmul.mubr.bf16.gmra.mrb[0].mxu0 %v48
  %v84 = vpop.f32.mrb[0].mxu0
  %v85 = vadd.f32 0.0, %v84
  %v86 = vpop.f32.mrb[0].mxu0
  %v87 = vpop.f32.mrb[0].mxu0
  %v88 = vadd.f32 0.0, %v87
  %v89 = vpop.f32.mrb[0].mxu0
  %90 = vdwg.mxu0
  %v91 = vadd.f32 %v21, %v85
  %v92 = vadd.f32 %v22, %v88
  %93 = vst [vmem:[#allocation2] sm:$0xff] %v91
  %94 = vst [vmem:[#allocation2 + $0x8] sm:$0xff] %v92
  // Predicated region
  $region18: #{gpt_forward.21} parent=0 // pred_check
    %p95 = pneg %p15
  $region19: #{gpt_forward.21} parent=0 // pred_check_branch
    %97 = sbr.rel (%p95) target = $region21
  $region20: #{gpt_forward.21} parent=0 // pred_region
    %v98 = vld [vmem:[#allocation2] sm:$0xff]
    %v99 = vld [vmem:[#allocation2 + $0x8] sm:$0xff]
    %v100 = vld [vmem:[%s2] sm:$0x1]
    %v102 = vlaneseq
    %v103 = vshrl.u32 %v102, 7
    %v104 = vsub.s32 0, %v103
    %v105 = vrot.slane %v100, %v104
    %v107 = vadd.f32 %v98, %v105
    %v108 = vadd.f32 %v99, %v105
    %v109 = vmul.f32 %v107, 0.5
    %v110 = vmul.f32 %v108, 0.5
    %v111 = vmul.f32 %v107, 0.70710677
    %v112 = vmul.f32 %v108, 0.70710677
    %vm113 = vcmp.lt.f32.partialorder %v111, 0.0
    %vm114 = vcmp.lt.f32.partialorder %v112, 0.0
    %v115 = vsel %vm113, -1.0, 1.0
    %v116 = vsel %vm114, -1.0, 1.0
    %v117 = vand.u32 2147483647, %v111
    %v118 = vand.u32 2147483647, %v112
    %v119 = vmul.f32 %v117, 0.3275911
    %v120 = vmul.f32 %v118, 0.3275911
    %v121 = vadd.f32 %v119, 1.0
    %v122 = vadd.f32 %v120, 1.0
    %v123 = vrcp.pop %v121
    %v124 = vmul.f32 1.0, %v123
    %v125 = vrcp.pop %v122
    %v126 = vmul.f32 1.0, %v125
    %v127 = vmul.f32 %v124, 1.0614054
    %v128 = vmul.f32 %v126, 1.0614054
    %v129 = vadd.f32 %v127, -1.4531521
    %v130 = vadd.f32 %v128, -1.4531521
    %v131 = vmul.f32 %v129, %v124
    %v132 = vmul.f32 %v130, %v126
    %v133 = vadd.f32 %v131, 1.4214138
    %v134 = vadd.f32 %v132, 1.4214138
    %v135 = vmul.f32 %v133, %v124
    %v136 = vmul.f32 %v134, %v126
    %v137 = vadd.f32 %v135, -0.28449672
    %v138 = vadd.f32 %v136, -0.28449672
    %v139 = vmul.f32 %v137, %v124
    %v140 = vmul.f32 %v138, %v126
    %v141 = vadd.f32 %v139, 0.2548296
    %v142 = vadd.f32 %v140, 0.2548296
    %v143 = vmul.f32 %v141, %v124
    %v144 = vmul.f32 %v142, %v126
    %v145 = vsub.f32 0.0, %v117
    %v146 = vsub.f32 0.0, %v118
    %v147 = vmul.f32 %v145, %v117
    %v148 = vmul.f32 %v146, %v118
    %v149 = vmul.f32 %v147, 1.442695
    %v150 = vpow.pop %v149
    %v151 = vmul.f32 %v148, 1.442695
    %v152 = vpow.pop %v151
    %v153 = vmul.f32 %v143, %v150
    %v154 = vmul.f32 %v144, %v152
    %v155 = vsub.f32 1.0, %v153
    %v156 = vsub.f32 1.0, %v154
    %v157 = vmul.f32 %v115, %v155
    %v158 = vmul.f32 %v116, %v156
    %v159 = vadd.f32 %v157, 1.0
    %v160 = vadd.f32 %v158, 1.0
    %v161 = vmul.f32 %v109, %v159
    %v162 = vmul.f32 %v110, %v160
    %v163 = vpack.c.bf16 %v162, %v161
    %v165 = vunpack.c.l.b16 %v163
    %v166 = vunpack.c.h.b16 %v163
    %v167 = vpack.c.b16 %v165, %v165
    %v168 = vpack.c.b16 %v166, %v166
    %171 = vst [vmem:[%s3] sm:$0xf] %v167
    %172 = vst [vmem:[%s3 + $0x4] sm:$0xf] %v168
  $region21: #{gpt_forward.21} parent=0 // pred_fallthru
    _
  // Predicated region
  $region22: #{gpt_forward.21} parent=0 // pred_check
    _
  $region23: #{gpt_forward.21} parent=0 // pred_check_branch
    %174 = sbr.rel (0) target = $region25
  $region24: #{gpt_forward.21} parent=0 // pred_region
    _
  $region25: #{gpt_forward.21} parent=0 // pred_fallthru
    _
  // Predicated region
  $region26: #{gpt_forward.21} parent=0 // pred_check
    _
  $region27: #{gpt_forward.21} parent=0 // pred_check_branch
    %176 = sbr.rel (0) target = $region29
  $region28: #{gpt_forward.21} parent=0 // pred_region
    _
  $region29: #{gpt_forward.21} parent=0 // pred_fallthru
    _

</llo_original>
